<compile_context>
chip_gen: v6e
topology: v6e:2x2x1
jax: 0.10.0
libtpu: 0.0.40
codegen_flags: <defaults>
</compile_context>

<pallas_src>
import math
import functools

import jax
import jax.numpy as jnp
from jax.experimental import pallas as pl
from jax.experimental.pallas import tpu as pltpu

NEG_INF = -1e30  # stand-in for float('-inf') in additive attention masks


# ----------------------------- Pallas kernels -----------------------------

def _mha_ln_kernel(*refs, nhead, is_self, eps):
    """Fused multi-head attention block for one batch element:
       QKV projection (fused weight), per-head SDPA, output projection,
       residual add + post-LayerNorm."""
    if is_self:
        (q_ref, wqkv_ref, bqkv_ref, wo_ref, bo_ref,
         g_ref, b_ref, mask_ref, pad_ref, o_ref) = refs
        kv_ref = q_ref
    else:
        (q_ref, kv_ref, wqkv_ref, bqkv_ref, wo_ref, bo_ref,
         g_ref, b_ref, mask_ref, pad_ref, o_ref) = refs

    E = wo_ref.shape[0]
    Dh = E // nhead
    scale = 1.0 / math.sqrt(Dh)

    x = q_ref[0]                                   # (Sq, E) f32 — residual source
    xb = x.astype(jnp.bfloat16)
    wqkv = wqkv_ref[...].astype(jnp.bfloat16)      # (E, 3E)
    bqkv = bqkv_ref[...]                           # (1, 3E) f32

    if is_self:
        # single fused (Sq, E) @ (E, 3E) projection
        qkv = jnp.dot(xb, wqkv, preferred_element_type=jnp.float32) + bqkv
        q = qkv[:, :E]
        k = qkv[:, E:2 * E]
        v = qkv[:, 2 * E:]
    else:
        kvb = kv_ref[0].astype(jnp.bfloat16)       # (Sk, E)
        q = jnp.dot(xb, wqkv[:, :E],
                    preferred_element_type=jnp.float32) + bqkv[:, :E]
        kv = jnp.dot(kvb, wqkv[:, E:],
                     preferred_element_type=jnp.float32) + bqkv[:, E:]
        k = kv[:, :E]
        v = kv[:, E:]

    # additive mask built in-kernel: (Sq,Sk) causal/attn mask + (1,Sk) pad row
    m = mask_ref[...] + pad_ref[0]

    # Heads via static lane slices (keeps all matmuls 2-D; at Dh=8 each head
    # matmul is sub-MXU-tile anyway — for large Dh/H switch to a batched
    # einsum over a leading head dim like the flash-attention pattern).
    head_outs = []
    for h in range(nhead):
        lo, hi = h * Dh, (h + 1) * Dh
        qh = q[:, lo:hi].astype(jnp.bfloat16)
        kh = k[:, lo:hi].astype(jnp.bfloat16)
        vh = v[:, lo:hi].astype(jnp.bfloat16)
        s = jax.lax.dot_general(qh, kh, (((1,), (1,)), ((), ())),
                                preferred_element_type=jnp.float32)
        s = s * scale + m
        s = s - jnp.max(s, axis=-1, keepdims=True)
        p = jnp.exp(s)
        p = p * pl.reciprocal(jnp.sum(p, axis=-1, keepdims=True), approx=True)
        head_outs.append(jnp.dot(p.astype(jnp.bfloat16), vh,
                                 preferred_element_type=jnp.float32))
    attn = jnp.concatenate(head_outs, axis=-1)     # (Sq, E)

    # output projection + residual + post-LayerNorm (f32 epilogue)
    o = jnp.dot(attn.astype(jnp.bfloat16), wo_ref[...].astype(jnp.bfloat16),
                preferred_element_type=jnp.float32) + bo_ref[...]
    y = x + o
    mu = jnp.mean(y, axis=-1, keepdims=True)
    var = jnp.mean((y - mu) * (y - mu), axis=-1, keepdims=True)
    y = (y - mu) * jax.lax.rsqrt(var + eps)
    o_ref[0] = (y * g_ref[...] + b_ref[...]).astype(o_ref.dtype)


def mha_block(q_src, kv_src, attn_p, attn_mask, pad_add, nhead, ln_g, ln_b,
              eps=1e-5):
    """q_src: (B,Sq,E); kv_src: (B,Sk,E) or None (self-attn);
       attn_mask: (Sq,Sk) additive f32; pad_add: (B,1,Sk) additive f32."""
    B, Sq, E = q_src.shape
    is_self = kv_src is None
    Sk = Sq if is_self else kv_src.shape[1]

    in_arrays = [q_src]
    in_specs = [pl.BlockSpec((1, Sq, E), lambda b: (b, 0, 0))]
    if not is_self:
        in_arrays.append(kv_src)
        in_specs.append(pl.BlockSpec((1, Sk, E), lambda b: (b, 0, 0)))
    in_arrays += [attn_p["wqkv"], attn_p["bqkv"].reshape(1, 3 * E),
                  attn_p["wo"], attn_p["bo"].reshape(1, E),
                  ln_g.reshape(1, E), ln_b.reshape(1, E),
                  attn_mask, pad_add]
    in_specs += [
        pl.BlockSpec((E, 3 * E), lambda b: (0, 0)),
        pl.BlockSpec((1, 3 * E), lambda b: (0, 0)),
        pl.BlockSpec((E, E), lambda b: (0, 0)),
        pl.BlockSpec((1, E), lambda b: (0, 0)),
        pl.BlockSpec((1, E), lambda b: (0, 0)),
        pl.BlockSpec((1, E), lambda b: (0, 0)),
        pl.BlockSpec((Sq, Sk), lambda b: (0, 0)),
        pl.BlockSpec((1, 1, Sk), lambda b: (b, 0, 0)),
    ]
    return pl.pallas_call(
        functools.partial(_mha_ln_kernel, nhead=nhead, is_self=is_self, eps=eps),
        out_shape=jax.ShapeDtypeStruct((B, Sq, E), jnp.float32),
        grid=(B,),
        in_specs=in_specs,
        out_specs=pl.BlockSpec((1, Sq, E), lambda b: (b, 0, 0)),
        compiler_params=pltpu.CompilerParams(dimension_semantics=("parallel",)),
    )(*in_arrays)


def _ffn_ln_kernel(x_ref, w1_ref, b1_ref, w2_ref, b2_ref, g_ref, b_ref, o_ref,
                   *, eps):
    """Fused FFN (Linear-ReLU-Linear) + residual + post-LayerNorm."""
    x = x_ref[...]                                 # (rb, E) f32 residual
    h = jnp.dot(x.astype(jnp.bfloat16), w1_ref[...].astype(jnp.bfloat16),
                preferred_element_type=jnp.float32) + b1_ref[...]
    h = jnp.maximum(h, 0.0)
    y = jnp.dot(h.astype(jnp.bfloat16), w2_ref[...].astype(jnp.bfloat16),
                preferred_element_type=jnp.float32) + b2_ref[...]
    y = x + y
    mu = jnp.mean(y, axis=-1, keepdims=True)
    var = jnp.mean((y - mu) * (y - mu), axis=-1, keepdims=True)
    y = (y - mu) * jax.lax.rsqrt(var + eps)
    o_ref[...] = (y * g_ref[...] + b_ref[...]).astype(o_ref.dtype)


def _pick_row_block(M):
    # measured sweet spot 256-512 rows when scaled; at demo scale one block
    for rb in (512, 256, 128):
        if M % rb == 0:
            return rb
    return M


def ffn_ln(x2d, w1, b1, w2, b2, g, b, eps=1e-5):
    M, E = x2d.shape
    FF = w1.shape[1]
    rb = _pick_row_block(M)
    return pl.pallas_call(
        functools.partial(_ffn_ln_kernel, eps=eps),
        out_shape=jax.ShapeDtypeStruct((M, E), jnp.float32),
        grid=(pl.cdiv(M, rb),),
        in_specs=[
            pl.BlockSpec((rb, E), lambda i: (i, 0)),
            pl.BlockSpec((E, FF), lambda i: (0, 0)),
            pl.BlockSpec((1, FF), lambda i: (0, 0)),
            pl.BlockSpec((FF, E), lambda i: (0, 0)),
            pl.BlockSpec((1, E), lambda i: (0, 0)),
            pl.BlockSpec((1, E), lambda i: (0, 0)),
            pl.BlockSpec((1, E), lambda i: (0, 0)),
        ],
        out_specs=pl.BlockSpec((rb, E), lambda i: (i, 0)),
        compiler_params=pltpu.CompilerParams(dimension_semantics=("parallel",)),
    )(x2d, w1, b1.reshape(1, FF), w2, b2.reshape(1, E),
      g.reshape(1, E), b.reshape(1, E))


def _mlp2_kernel(x_ref, w1_ref, b1_ref, w2_ref, b2_ref, o_ref, *, log_softmax_out):
    """Fused Linear-GELU-Linear head; optional fused log-softmax epilogue."""
    x = x_ref[...].astype(jnp.bfloat16)
    h = jnp.dot(x, w1_ref[...].astype(jnp.bfloat16),
                preferred_element_type=jnp.float32) + b1_ref[...]
    h = 0.5 * h * (1.0 + jax.lax.erf(h * 0.7071067811865476))   # exact GELU, f32
    y = jnp.dot(h.astype(jnp.bfloat16), w2_ref[...].astype(jnp.bfloat16),
                preferred_element_type=jnp.float32) + b2_ref[...]
    if log_softmax_out:
        mx = jnp.max(y, axis=-1, keepdims=True)
        s = y - mx
        lse = jnp.log(jnp.sum(jnp.exp(s), axis=-1, keepdims=True))
        y = s - lse
    o_ref[...] = y.astype(o_ref.dtype)


def mlp2(x2d, head, log_softmax_out=False):
    """nn.Sequential(Linear, GELU, Linear) on flattened rows (+optional lsm)."""
    w1, b1, w2, b2 = head
    M, Din = x2d.shape
    Dm = w1.shape[1]
    Dout = w2.shape[1]
    rb = _pick_row_block(M)
    return pl.pallas_call(
        functools.partial(_mlp2_kernel, log_softmax_out=log_softmax_out),
        out_shape=jax.ShapeDtypeStruct((M, Dout), jnp.float32),
        grid=(pl.cdiv(M, rb),),
        in_specs=[
            pl.BlockSpec((rb, Din), lambda i: (i, 0)),
            pl.BlockSpec((Din, Dm), lambda i: (0, 0)),
            pl.BlockSpec((1, Dm), lambda i: (0, 0)),
            pl.BlockSpec((Dm, Dout), lambda i: (0, 0)),
            pl.BlockSpec((1, Dout), lambda i: (0, 0)),
        ],
        out_specs=pl.BlockSpec((rb, Dout), lambda i: (i, 0)),
        compiler_params=pltpu.CompilerParams(dimension_semantics=("parallel",)),
    )(x2d, w1, b1.reshape(1, Dm), w2, b2.reshape(1, Dout))


# --------------------------- model building blocks ---------------------------

def encoder_layer(x, p, attn_mask, pad_add, nhead):
    B, S, E = x.shape
    x = mha_block(x, None, p["self_attn"], attn_mask, pad_add, nhead,
                  p["ln1_g"], p["ln1_b"])
    x = ffn_ln(x.reshape(B * S, E), p["ff_w1"], p["ff_b1"],
               p["ff_w2"], p["ff_b2"], p["ln2_g"], p["ln2_b"]).reshape(B, S, E)
    return x


def decoder_layer(x, mem, p, tgt_mask, mem_mask, tgt_pad_add, mem_pad_add, nhead):
    B, S, E = x.shape
    x = mha_block(x, None, p["self_attn"], tgt_mask, tgt_pad_add, nhead,
                  p["ln1_g"], p["ln1_b"])
    x = mha_block(x, mem, p["cross_attn"], mem_mask, mem_pad_add, nhead,
                  p["ln2_g"], p["ln2_b"])
    x = ffn_ln(x.reshape(B * S, E), p["ff_w1"], p["ff_b1"],
               p["ff_w2"], p["ff_b2"], p["ln3_g"], p["ln3_b"]).reshape(B, S, E)
    return x


def causal_mask(sz):
    i = jnp.arange(sz)[:, None]
    j = jnp.arange(sz)[None, :]
    return jnp.where(j > i, NEG_INF, 0.0).astype(jnp.float32)


def make_pe(max_len, d_model):
    position = jnp.arange(max_len, dtype=jnp.float32)[:, None]
    div_term = jnp.exp(jnp.arange(0, d_model, 2, dtype=jnp.float32)
                       * (-math.log(10000.0) / d_model))
    ang = position * div_term
    pe = jnp.zeros((max_len, d_model), jnp.float32)
    pe = pe.at[:, 0::2].set(jnp.sin(ang))
    pe = pe.at[:, 1::2].set(jnp.cos(ang))
    return pe  # PyTorch stores (max_len, 1, d_model); we keep (max_len, d_model)


# ------------------------------- parameters -------------------------------

def _dense(key, in_dim, out_dim):
    kw, kb = jax.random.split(key)
    w = jax.random.normal(kw, (in_dim, out_dim), jnp.float32) * 0.05
    b = jax.random.normal(kb, (out_dim,), jnp.float32) * 0.02
    return w, b


def _init_attn(key, E):
    ks = jax.random.split(key, 4)
    wq, bq = _dense(ks[0], E, E)
    wk, bk = _dense(ks[1], E, E)
    wv, bv = _dense(ks[2], E, E)
    wo, bo = _dense(ks[3], E, E)
    # fused QKV weight/bias (review: one (E,3E) matmul instead of three)
    return dict(wqkv=jnp.concatenate([wq, wk, wv], axis=1),
                bqkv=jnp.concatenate([bq, bk, bv]),
                wo=wo, bo=bo)


def _init_enc_layer(key, E, FF):
    ks = jax.random.split(key, 3)
    p = dict(self_attn=_init_attn(ks[0], E))
    p["ff_w1"], p["ff_b1"] = _dense(ks[1], E, FF)
    p["ff_w2"], p["ff_b2"] = _dense(ks[2], FF, E)
    for n in ("ln1", "ln2"):
        p[n + "_g"] = jnp.ones((E,), jnp.float32)
        p[n + "_b"] = jnp.zeros((E,), jnp.float32)
    return p


def _init_dec_layer(key, E, FF):
    ks = jax.random.split(key, 4)
    p = dict(self_attn=_init_attn(ks[0], E), cross_attn=_init_attn(ks[1], E))
    p["ff_w1"], p["ff_b1"] = _dense(ks[2], E, FF)
    p["ff_w2"], p["ff_b2"] = _dense(ks[3], FF, E)
    for n in ("ln1", "ln2", "ln3"):
        p[n + "_g"] = jnp.ones((E,), jnp.float32)
        p[n + "_b"] = jnp.zeros((E,), jnp.float32)
    return p


def init_params(key, cfg):
    V, E, L, NL = cfg["vocab"], cfg["embed"], cfg["latent"], cfg["layers"]
    FF = 4 * E
    keys = jax.random.split(key, 6 + 2 * NL)
    params = {
        "embed": jax.random.normal(keys[0], (V, E), jnp.float32) * 0.1,
        "pe": make_pe(5000, E),
        "enc_layers": [_init_enc_layer(keys[1 + i], E, FF) for i in range(NL)],
        "dec_layers": [_init_dec_layer(keys[1 + NL + i], E, FF) for i in range(NL)],
    }
    k_eh, k_dh, k_dv = keys[1 + 2 * NL], keys[2 + 2 * NL], keys[3 + 2 * NL]
    ke1, ke2 = jax.random.split(k_eh)
    params["enc_head"] = (*_dense(ke1, E, 2 * L), *_dense(ke2, 2 * L, L))
    kd1, kd2 = jax.random.split(k_dh)
    params["dec_hidden"] = (*_dense(kd1, L, E // 8), *_dense(kd2, E // 8, E))
    kv1, kv2 = jax.random.split(k_dv)
    params["dec_vocab"] = (*_dense(kv1, E, V // 8), *_dense(kv2, V // 8, V))
    return params


# ------------------------------- full forward -------------------------------

def transformer_forward(params, input_data, target_data, timestamp, eps_noise, cfg):
    """Equivalent to Transformer.forward with vae_setting=True (eval mode)."""
    B, S_src = input_data.shape
    _, S_tgt = target_data.shape
    E, H, L, V = cfg["embed"], cfg["nhead"], cfg["latent"], cfg["vocab"]

    # embedding lookup (gather) stays in plain JAX glue
    emb = params["embed"]
    input_embedding = jnp.take(emb, input_data, axis=0)     # (B, S_src, E)
    target_embedding = jnp.take(emb, target_data, axis=0)   # (B, S_tgt, E)

    src_mask = causal_mask(S_src)
    tgt_mask = causal_mask(S_tgt)
    # additive key-padding rows (B,1,S) — no (B*H,Sq,Sk) broadcast materialized
    src_pad_add = jnp.where(input_data == 0, NEG_INF, 0.0
                            ).astype(jnp.float32)[:, None, :]
    tgt_pad_add = jnp.where(target_data == 0, NEG_INF, 0.0
                            ).astype(jnp.float32)[:, None, :]
    # embedding_dropout / positional-encoding dropout: eval-mode identity.

    # ---------------- encoder.vae_encode ----------------
    T = timestamp.shape[0]
    pe_slice = params["pe"][:T][:, None, :]   # (T,1,E), T == B (reference quirk)
    x = input_embedding + pe_slice
    for lp in params["enc_layers"]:
        x = encoder_layer(x, lp, src_mask, src_pad_add, H)
    hidden = x
    mean = mlp2(hidden.reshape(B * S_src, E),
                params["enc_head"]).reshape(B, S_src, L)
    # reference applies the SAME nn.Sequential again -> identical result
    log_var = mean
    std = jnp.exp(0.5 * log_var)
    z = eps_noise * std + mean                                # reparameterize

    # ---------------- decoder (vae path) ----------------
    tgt = target_embedding + pe_slice
    mem = mlp2(z.reshape(B * S_src, L),
               params["dec_hidden"]).reshape(B, S_src, E)
    y = tgt
    for lp in params["dec_layers"]:
        y = decoder_layer(y, mem, lp, tgt_mask, src_mask,
                          tgt_pad_add, src_pad_add, H)
    # vocab head with fused log-softmax epilogue (logits never hit HBM twice)
    log_prob = mlp2(y.reshape(B * S_tgt, E), params["dec_vocab"],
                    log_softmax_out=True).reshape(B, S_tgt, V)

    # Transformer.forward returns (log_prob, mean, log_var, z) where its
    # `mean`/`log_var` names are swapped vs the encoder's return order — they
    # are numerically identical anyway.
    return log_prob, log_var, mean, z


# ----------------------------------- main -----------------------------------

if __name__ == "__main__":
    cfg = dict(vocab=64, embed=32, nhead=4, latent=16, layers=2)
    B, S = 2, 8

    key = jax.random.PRNGKey(0)
    k_in, k_tgt, k_par, k_eps = jax.random.split(key, 4)
    # tokens drawn from [1, vocab) so no pad (pad_idx=0) rows are fully masked
    input_data = jax.random.randint(k_in, (B, S), 1, cfg["vocab"], dtype=jnp.int32)
    target_data = jax.random.randint(k_tgt, (B, S), 1, cfg["vocab"], dtype=jnp.int32)
    timestamp = jnp.arange(B, dtype=jnp.int32)   # timestamp.size(0) must equal B
    eps_noise = jax.random.normal(k_eps, (B, S, cfg["latent"]), jnp.float32)

    params = init_params(k_par, cfg)

    log_prob, mean, log_var, z = transformer_forward(
        params, input_data, target_data, timestamp, eps_noise, cfg)
    jax.block_until_ready((log_prob, mean, log_var, z))

    assert log_prob.shape == (B, S, cfg["vocab"])
    assert z.shape == (B, S, cfg["latent"])
    assert bool(jnp.all(jnp.isfinite(log_prob)))
    print("KERNEL_OK")
</pallas_src>

<mosaic_0001>
module attributes {stable_mosaic.version = 11 : i64} {
  func.func @_mha_ln_kernel(%arg0: i32, %arg1: memref<1x8x32xf32, #tpu.memory_space<vmem>>, %arg2: memref<32x96xf32, #tpu.memory_space<vmem>>, %arg3: memref<1x96xf32, #tpu.memory_space<vmem>>, %arg4: memref<32x32xf32, #tpu.memory_space<vmem>>, %arg5: memref<1x32xf32, #tpu.memory_space<vmem>>, %arg6: memref<1x32xf32, #tpu.memory_space<vmem>>, %arg7: memref<1x32xf32, #tpu.memory_space<vmem>>, %arg8: memref<8x8xf32, #tpu.memory_space<vmem>>, %arg9: memref<1x1x8xf32, #tpu.memory_space<vmem>>, %arg10: memref<1x8x32xf32, #tpu.memory_space<vmem>>) attributes {dimension_semantics = [#tpu.dimension_semantics<parallel>], iteration_bounds = array<i64: 2>, scalar_prefetch = 0 : i64, scratch_operands = 0 : i64, tpu.core_type = #tpu.core_type<tc>, window_params = [{transform_indices = @transform_0, window_bounds = array<i64: 1, 8, 32>}, {pipeline_mode = #tpu.pipeline_mode<synchronous>, transform_indices = @transform_1, window_bounds = array<i64: 32, 96>}, {pipeline_mode = #tpu.pipeline_mode<synchronous>, transform_indices = @transform_2, window_bounds = array<i64: 1, 96>}, {pipeline_mode = #tpu.pipeline_mode<synchronous>, transform_indices = @transform_3, window_bounds = array<i64: 32, 32>}, {pipeline_mode = #tpu.pipeline_mode<synchronous>, transform_indices = @transform_4, window_bounds = array<i64: 1, 32>}, {pipeline_mode = #tpu.pipeline_mode<synchronous>, transform_indices = @transform_5, window_bounds = array<i64: 1, 32>}, {pipeline_mode = #tpu.pipeline_mode<synchronous>, transform_indices = @transform_6, window_bounds = array<i64: 1, 32>}, {pipeline_mode = #tpu.pipeline_mode<synchronous>, transform_indices = @transform_7, window_bounds = array<i64: 8, 8>}, {transform_indices = @transform_8, window_bounds = array<i64: 1, 1, 8>}, {transform_indices = @transform_9, window_bounds = array<i64: 1, 8, 32>}]} {
    %c0 = arith.constant 0 : index
    %c0_0 = arith.constant 0 : index
    %c0_1 = arith.constant 0 : index
    %0 = vector.load %arg1[%c0, %c0_0, %c0_1] : memref<1x8x32xf32, #tpu.memory_space<vmem>>, vector<1x8x32xf32>
    %1 = vector.shape_cast %0 : vector<1x8x32xf32> to vector<8x32xf32>
    %2 = arith.truncf %1 : vector<8x32xf32> to vector<8x32xbf16>
    %c0_2 = arith.constant 0 : index
    %c0_3 = arith.constant 0 : index
    %3 = vector.load %arg2[%c0_2, %c0_3] : memref<32x96xf32, #tpu.memory_space<vmem>>, vector<32x96xf32>
    %4 = arith.truncf %3 : vector<32x96xf32> to vector<32x96xbf16>
    %c0_4 = arith.constant 0 : index
    %c0_5 = arith.constant 0 : index
    %5 = vector.load %arg3[%c0_4, %c0_5] : memref<1x96xf32, #tpu.memory_space<vmem>>, vector<1x96xf32>
    %cst = arith.constant dense<0.000000e+00> : vector<8x96xf32>
    %6 = tpu.matmul %2, %4, %cst {dimension_numbers = #tpu.dot_dimension_numbers<[1], [0], [0], [1], [0, 0, 1, 1], [], []>} : vector<8x32xbf16>, vector<32x96xbf16>, vector<8x96xf32> -> vector<8x96xf32>
    %7 = vector.broadcast %5 : vector<1x96xf32> to vector<8x96xf32>
    %8 = arith.addf %6, %7 : vector<8x96xf32>
    %9 = vector.extract_strided_slice %8 {offsets = [0, 0], sizes = [8, 32], strides = [1, 1]} : vector<8x96xf32> to vector<8x32xf32>
    %10 = vector.extract_strided_slice %8 {offsets = [0, 32], sizes = [8, 32], strides = [1, 1]} : vector<8x96xf32> to vector<8x32xf32>
    %11 = vector.extract_strided_slice %8 {offsets = [0, 64], sizes = [8, 32], strides = [1, 1]} : vector<8x96xf32> to vector<8x32xf32>
    %c0_6 = arith.constant 0 : index
    %c0_7 = arith.constant 0 : index
    %12 = vector.load %arg8[%c0_6, %c0_7] : memref<8x8xf32, #tpu.memory_space<vmem>>, vector<8x8xf32>
    %c0_8 = arith.constant 0 : index
    %c0_9 = arith.constant 0 : index
    %c0_10 = arith.constant 0 : index
    %13 = vector.load %arg9[%c0_8, %c0_9, %c0_10] : memref<1x1x8xf32, #tpu.memory_space<vmem>>, vector<1x1x8xf32>
    %14 = vector.shape_cast %13 : vector<1x1x8xf32> to vector<1x8xf32>
    %15 = vector.broadcast %14 : vector<1x8xf32> to vector<8x8xf32>
    %16 = arith.addf %12, %15 : vector<8x8xf32>
    %17 = vector.extract_strided_slice %9 {offsets = [0, 0], sizes = [8, 8], strides = [1, 1]} : vector<8x32xf32> to vector<8x8xf32>
    %18 = arith.truncf %17 : vector<8x8xf32> to vector<8x8xbf16>
    %19 = vector.extract_strided_slice %10 {offsets = [0, 0], sizes = [8, 8], strides = [1, 1]} : vector<8x32xf32> to vector<8x8xf32>
    %20 = arith.truncf %19 : vector<8x8xf32> to vector<8x8xbf16>
    %21 = vector.extract_strided_slice %11 {offsets = [0, 0], sizes = [8, 8], strides = [1, 1]} : vector<8x32xf32> to vector<8x8xf32>
    %22 = arith.truncf %21 : vector<8x8xf32> to vector<8x8xbf16>
    %cst_11 = arith.constant dense<0.000000e+00> : vector<8x8xf32>
    %23 = tpu.matmul %18, %20, %cst_11 {dimension_numbers = #tpu.dot_dimension_numbers<[1], [1], [0], [0], [0, 0, 1, 0], [], []>} : vector<8x8xbf16>, vector<8x8xbf16>, vector<8x8xf32> -> vector<8x8xf32>
    %cst_12 = arith.constant 0.353553385 : f32
    %24 = vector.broadcast %cst_12 : f32 to vector<8x8xf32>
    %25 = arith.mulf %23, %24 : vector<8x8xf32>
    %26 = arith.addf %25, %16 : vector<8x8xf32>
    %cst_13 = arith.constant dense<0xFF800000> : vector<8xf32>
    %27 = vector.multi_reduction <maximumf>, %26, %cst_13 [1] : vector<8x8xf32> to vector<8xf32>
    %28 = vector.shape_cast %27 : vector<8xf32> to vector<8x1xf32>
    %29 = vector.broadcast %28 : vector<8x1xf32> to vector<8x8xf32>
    %30 = arith.subf %26, %29 : vector<8x8xf32>
    %31 = math.exp %30 : vector<8x8xf32>
    %cst_14 = arith.constant dense<0.000000e+00> : vector<8xf32>
    %32 = vector.multi_reduction <add>, %31, %cst_14 [1] : vector<8x8xf32> to vector<8xf32>
    %33 = vector.shape_cast %32 : vector<8xf32> to vector<8x1xf32>
    %34 = tpu.reciprocal %33 {approx = true} : vector<8x1xf32> -> vector<8x1xf32>
    %35 = vector.broadcast %34 : vector<8x1xf32> to vector<8x8xf32>
    %36 = arith.mulf %31, %35 : vector<8x8xf32>
    %37 = arith.truncf %36 : vector<8x8xf32> to vector<8x8xbf16>
    %cst_15 = arith.constant dense<0.000000e+00> : vector<8x8xf32>
    %38 = tpu.matmul %37, %22, %cst_15 {dimension_numbers = #tpu.dot_dimension_numbers<[1], [0], [0], [1], [0, 0, 1, 1], [], []>} : vector<8x8xbf16>, vector<8x8xbf16>, vector<8x8xf32> -> vector<8x8xf32>
    %39 = vector.extract_strided_slice %9 {offsets = [0, 8], sizes = [8, 8], strides = [1, 1]} : vector<8x32xf32> to vector<8x8xf32>
    %40 = arith.truncf %39 : vector<8x8xf32> to vector<8x8xbf16>
    %41 = vector.extract_strided_slice %10 {offsets = [0, 8], sizes = [8, 8], strides = [1, 1]} : vector<8x32xf32> to vector<8x8xf32>
    %42 = arith.truncf %41 : vector<8x8xf32> to vector<8x8xbf16>
    %43 = vector.extract_strided_slice %11 {offsets = [0, 8], sizes = [8, 8], strides = [1, 1]} : vector<8x32xf32> to vector<8x8xf32>
    %44 = arith.truncf %43 : vector<8x8xf32> to vector<8x8xbf16>
    %cst_16 = arith.constant dense<0.000000e+00> : vector<8x8xf32>
    %45 = tpu.matmul %40, %42, %cst_16 {dimension_numbers = #tpu.dot_dimension_numbers<[1], [1], [0], [0], [0, 0, 1, 0], [], []>} : vector<8x8xbf16>, vector<8x8xbf16>, vector<8x8xf32> -> vector<8x8xf32>
    %cst_17 = arith.constant 0.353553385 : f32
    %46 = vector.broadcast %cst_17 : f32 to vector<8x8xf32>
    %47 = arith.mulf %45, %46 : vector<8x8xf32>
    %48 = arith.addf %47, %16 : vector<8x8xf32>
    %cst_18 = arith.constant dense<0xFF800000> : vector<8xf32>
    %49 = vector.multi_reduction <maximumf>, %48, %cst_18 [1] : vector<8x8xf32> to vector<8xf32>
    %50 = vector.shape_cast %49 : vector<8xf32> to vector<8x1xf32>
    %51 = vector.broadcast %50 : vector<8x1xf32> to vector<8x8xf32>
    %52 = arith.subf %48, %51 : vector<8x8xf32>
    %53 = math.exp %52 : vector<8x8xf32>
    %cst_19 = arith.constant dense<0.000000e+00> : vector<8xf32>
    %54 = vector.multi_reduction <add>, %53, %cst_19 [1] : vector<8x8xf32> to vector<8xf32>
    %55 = vector.shape_cast %54 : vector<8xf32> to vector<8x1xf32>
    %56 = tpu.reciprocal %55 {approx = true} : vector<8x1xf32> -> vector<8x1xf32>
    %57 = vector.broadcast %56 : vector<8x1xf32> to vector<8x8xf32>
    %58 = arith.mulf %53, %57 : vector<8x8xf32>
    %59 = arith.truncf %58 : vector<8x8xf32> to vector<8x8xbf16>
    %cst_20 = arith.constant dense<0.000000e+00> : vector<8x8xf32>
    %60 = tpu.matmul %59, %44, %cst_20 {dimension_numbers = #tpu.dot_dimension_numbers<[1], [0], [0], [1], [0, 0, 1, 1], [], []>} : vector<8x8xbf16>, vector<8x8xbf16>, vector<8x8xf32> -> vector<8x8xf32>
    %61 = vector.extract_strided_slice %9 {offsets = [0, 16], sizes = [8, 8], strides = [1, 1]} : vector<8x32xf32> to vector<8x8xf32>
    %62 = arith.truncf %61 : vector<8x8xf32> to vector<8x8xbf16>
    %63 = vector.extract_strided_slice %10 {offsets = [0, 16], sizes = [8, 8], strides = [1, 1]} : vector<8x32xf32> to vector<8x8xf32>
    %64 = arith.truncf %63 : vector<8x8xf32> to vector<8x8xbf16>
    %65 = vector.extract_strided_slice %11 {offsets = [0, 16], sizes = [8, 8], strides = [1, 1]} : vector<8x32xf32> to vector<8x8xf32>
    %66 = arith.truncf %65 : vector<8x8xf32> to vector<8x8xbf16>
    %cst_21 = arith.constant dense<0.000000e+00> : vector<8x8xf32>
    %67 = tpu.matmul %62, %64, %cst_21 {dimension_numbers = #tpu.dot_dimension_numbers<[1], [1], [0], [0], [0, 0, 1, 0], [], []>} : vector<8x8xbf16>, vector<8x8xbf16>, vector<8x8xf32> -> vector<8x8xf32>
    %cst_22 = arith.constant 0.353553385 : f32
    %68 = vector.broadcast %cst_22 : f32 to vector<8x8xf32>
    %69 = arith.mulf %67, %68 : vector<8x8xf32>
    %70 = arith.addf %69, %16 : vector<8x8xf32>
    %cst_23 = arith.constant dense<0xFF800000> : vector<8xf32>
    %71 = vector.multi_reduction <maximumf>, %70, %cst_23 [1] : vector<8x8xf32> to vector<8xf32>
    %72 = vector.shape_cast %71 : vector<8xf32> to vector<8x1xf32>
    %73 = vector.broadcast %72 : vector<8x1xf32> to vector<8x8xf32>
    %74 = arith.subf %70, %73 : vector<8x8xf32>
    %75 = math.exp %74 : vector<8x8xf32>
    %cst_24 = arith.constant dense<0.000000e+00> : vector<8xf32>
    %76 = vector.multi_reduction <add>, %75, %cst_24 [1] : vector<8x8xf32> to vector<8xf32>
    %77 = vector.shape_cast %76 : vector<8xf32> to vector<8x1xf32>
    %78 = tpu.reciprocal %77 {approx = true} : vector<8x1xf32> -> vector<8x1xf32>
    %79 = vector.broadcast %78 : vector<8x1xf32> to vector<8x8xf32>
    %80 = arith.mulf %75, %79 : vector<8x8xf32>
    %81 = arith.truncf %80 : vector<8x8xf32> to vector<8x8xbf16>
    %cst_25 = arith.constant dense<0.000000e+00> : vector<8x8xf32>
    %82 = tpu.matmul %81, %66, %cst_25 {dimension_numbers = #tpu.dot_dimension_numbers<[1], [0], [0], [1], [0, 0, 1, 1], [], []>} : vector<8x8xbf16>, vector<8x8xbf16>, vector<8x8xf32> -> vector<8x8xf32>
    %83 = vector.extract_strided_slice %9 {offsets = [0, 24], sizes = [8, 8], strides = [1, 1]} : vector<8x32xf32> to vector<8x8xf32>
    %84 = arith.truncf %83 : vector<8x8xf32> to vector<8x8xbf16>
    %85 = vector.extract_strided_slice %10 {offsets = [0, 24], sizes = [8, 8], strides = [1, 1]} : vector<8x32xf32> to vector<8x8xf32>
    %86 = arith.truncf %85 : vector<8x8xf32> to vector<8x8xbf16>
    %87 = vector.extract_strided_slice %11 {offsets = [0, 24], sizes = [8, 8], strides = [1, 1]} : vector<8x32xf32> to vector<8x8xf32>
    %88 = arith.truncf %87 : vector<8x8xf32> to vector<8x8xbf16>
    %cst_26 = arith.constant dense<0.000000e+00> : vector<8x8xf32>
    %89 = tpu.matmul %84, %86, %cst_26 {dimension_numbers = #tpu.dot_dimension_numbers<[1], [1], [0], [0], [0, 0, 1, 0], [], []>} : vector<8x8xbf16>, vector<8x8xbf16>, vector<8x8xf32> -> vector<8x8xf32>
    %cst_27 = arith.constant 0.353553385 : f32
    %90 = vector.broadcast %cst_27 : f32 to vector<8x8xf32>
    %91 = arith.mulf %89, %90 : vector<8x8xf32>
    %92 = arith.addf %91, %16 : vector<8x8xf32>
    %cst_28 = arith.constant dense<0xFF800000> : vector<8xf32>
    %93 = vector.multi_reduction <maximumf>, %92, %cst_28 [1] : vector<8x8xf32> to vector<8xf32>
    %94 = vector.shape_cast %93 : vector<8xf32> to vector<8x1xf32>
    %95 = vector.broadcast %94 : vector<8x1xf32> to vector<8x8xf32>
    %96 = arith.subf %92, %95 : vector<8x8xf32>
    %97 = math.exp %96 : vector<8x8xf32>
    %cst_29 = arith.constant dense<0.000000e+00> : vector<8xf32>
    %98 = vector.multi_reduction <add>, %97, %cst_29 [1] : vector<8x8xf32> to vector<8xf32>
    %99 = vector.shape_cast %98 : vector<8xf32> to vector<8x1xf32>
    %100 = tpu.reciprocal %99 {approx = true} : vector<8x1xf32> -> vector<8x1xf32>
    %101 = vector.broadcast %100 : vector<8x1xf32> to vector<8x8xf32>
    %102 = arith.mulf %97, %101 : vector<8x8xf32>
    %103 = arith.truncf %102 : vector<8x8xf32> to vector<8x8xbf16>
    %cst_30 = arith.constant dense<0.000000e+00> : vector<8x8xf32>
    %104 = tpu.matmul %103, %88, %cst_30 {dimension_numbers = #tpu.dot_dimension_numbers<[1], [0], [0], [1], [0, 0, 1, 1], [], []>} : vector<8x8xbf16>, vector<8x8xbf16>, vector<8x8xf32> -> vector<8x8xf32>
    %105 = tpu.concatenate %38, %60, %82, %104 in 1 : vector<8x8xf32>, vector<8x8xf32>, vector<8x8xf32>, vector<8x8xf32> -> vector<8x32xf32>
    %106 = arith.truncf %105 : vector<8x32xf32> to vector<8x32xbf16>
    %c0_31 = arith.constant 0 : index
    %c0_32 = arith.constant 0 : index
    %107 = vector.load %arg4[%c0_31, %c0_32] : memref<32x32xf32, #tpu.memory_space<vmem>>, vector<32x32xf32>
    %108 = arith.truncf %107 : vector<32x32xf32> to vector<32x32xbf16>
    %cst_33 = arith.constant dense<0.000000e+00> : vector<8x32xf32>
    %109 = tpu.matmul %106, %108, %cst_33 {dimension_numbers = #tpu.dot_dimension_numbers<[1], [0], [0], [1], [0, 0, 1, 1], [], []>} : vector<8x32xbf16>, vector<32x32xbf16>, vector<8x32xf32> -> vector<8x32xf32>
    %c0_34 = arith.constant 0 : index
    %c0_35 = arith.constant 0 : index
    %110 = vector.load %arg5[%c0_34, %c0_35] : memref<1x32xf32, #tpu.memory_space<vmem>>, vector<1x32xf32>
    %111 = vector.broadcast %110 : vector<1x32xf32> to vector<8x32xf32>
    %112 = arith.addf %109, %111 : vector<8x32xf32>
    %113 = arith.addf %1, %112 : vector<8x32xf32>
    %cst_36 = arith.constant dense<0.000000e+00> : vector<8xf32>
    %114 = vector.multi_reduction <add>, %113, %cst_36 [1] : vector<8x32xf32> to vector<8xf32>
    %115 = vector.shape_cast %114 : vector<8xf32> to vector<8x1xf32>
    %cst_37 = arith.constant 3.200000e+01 : f32
    %116 = vector.broadcast %cst_37 : f32 to vector<8x1xf32>
    %117 = arith.divf %115, %116 : vector<8x1xf32>
    %118 = vector.broadcast %117 : vector<8x1xf32> to vector<8x32xf32>
    %119 = arith.subf %113, %118 : vector<8x32xf32>
    %120 = vector.broadcast %117 : vector<8x1xf32> to vector<8x32xf32>
    %121 = arith.subf %113, %120 : vector<8x32xf32>
    %122 = arith.mulf %119, %121 : vector<8x32xf32>
    %cst_38 = arith.constant dense<0.000000e+00> : vector<8xf32>
    %123 = vector.multi_reduction <add>, %122, %cst_38 [1] : vector<8x32xf32> to vector<8xf32>
    %124 = vector.shape_cast %123 : vector<8xf32> to vector<8x1xf32>
    %cst_39 = arith.constant 3.200000e+01 : f32
    %125 = vector.broadcast %cst_39 : f32 to vector<8x1xf32>
    %126 = arith.divf %124, %125 : vector<8x1xf32>
    %127 = vector.broadcast %117 : vector<8x1xf32> to vector<8x32xf32>
    %128 = arith.subf %113, %127 : vector<8x32xf32>
    %cst_40 = arith.constant 9.99999974E-6 : f32
    %129 = vector.broadcast %cst_40 : f32 to vector<8x1xf32>
    %130 = arith.addf %126, %129 : vector<8x1xf32>
    %131 = math.rsqrt %130 : vector<8x1xf32>
    %132 = vector.broadcast %131 : vector<8x1xf32> to vector<8x32xf32>
    %133 = arith.mulf %128, %132 : vector<8x32xf32>
    %c0_41 = arith.constant 0 : index
    %c0_42 = arith.constant 0 : index
    %134 = vector.load %arg6[%c0_41, %c0_42] : memref<1x32xf32, #tpu.memory_space<vmem>>, vector<1x32xf32>
    %135 = vector.broadcast %134 : vector<1x32xf32> to vector<8x32xf32>
    %136 = arith.mulf %133, %135 : vector<8x32xf32>
    %c0_43 = arith.constant 0 : index
    %c0_44 = arith.constant 0 : index
    %137 = vector.load %arg7[%c0_43, %c0_44] : memref<1x32xf32, #tpu.memory_space<vmem>>, vector<1x32xf32>
    %138 = vector.broadcast %137 : vector<1x32xf32> to vector<8x32xf32>
    %139 = arith.addf %136, %138 : vector<8x32xf32>
    %c0_45 = arith.constant 0 : index
    %c0_46 = arith.constant 0 : index
    %c0_47 = arith.constant 0 : index
    %140 = vector.load %arg10[%c0_45, %c0_46, %c0_47] : memref<1x8x32xf32, #tpu.memory_space<vmem>>, vector<1x8x32xf32>
    %141 = vector.shape_cast %140 : vector<1x8x32xf32> to vector<8x32xf32>
    %142 = vector.shape_cast %139 : vector<8x32xf32> to vector<1x8x32xf32>
    tpu.vector_store %arg10[%c0_45, %c0_46, %c0_47], %142 {strides = array<i32>} : memref<1x8x32xf32, #tpu.memory_space<vmem>>, vector<1x8x32xf32>,
    return
  }
  func.func @transform_0(%arg0: i32) -> (i32, i32, i32) {
    %c0_i32 = arith.constant 0 : i32
    %c0_i32_0 = arith.constant 0 : i32
    %c0_i32_1 = arith.constant 0 : i32
    return %arg0, %c0_i32, %c0_i32_0 : i32, i32, i32
  }
  func.func @transform_1(%arg0: i32) -> (i32, i32) {
    %c0_i32 = arith.constant 0 : i32
    %c0_i32_0 = arith.constant 0 : i32
    %c0_i32_1 = arith.constant 0 : i32
    return %c0_i32, %c0_i32_0 : i32, i32
  }
  func.func @transform_2(%arg0: i32) -> (i32, i32) {
    %c0_i32 = arith.constant 0 : i32
    %c0_i32_0 = arith.constant 0 : i32
    %c0_i32_1 = arith.constant 0 : i32
    return %c0_i32, %c0_i32_0 : i32, i32
  }
  func.func @transform_3(%arg0: i32) -> (i32, i32) {
    %c0_i32 = arith.constant 0 : i32
    %c0_i32_0 = arith.constant 0 : i32
    %c0_i32_1 = arith.constant 0 : i32
    return %c0_i32, %c0_i32_0 : i32, i32
  }
  func.func @transform_4(%arg0: i32) -> (i32, i32) {
    %c0_i32 = arith.constant 0 : i32
    %c0_i32_0 = arith.constant 0 : i32
    %c0_i32_1 = arith.constant 0 : i32
    return %c0_i32, %c0_i32_0 : i32, i32
  }
  func.func @transform_5(%arg0: i32) -> (i32, i32) {
    %c0_i32 = arith.constant 0 : i32
    %c0_i32_0 = arith.constant 0 : i32
    %c0_i32_1 = arith.constant 0 : i32
    return %c0_i32, %c0_i32_0 : i32, i32
  }
  func.func @transform_6(%arg0: i32) -> (i32, i32) {
    %c0_i32 = arith.constant 0 : i32
    %c0_i32_0 = arith.constant 0 : i32
    %c0_i32_1 = arith.constant 0 : i32
    return %c0_i32, %c0_i32_0 : i32, i32
  }
  func.func @transform_7(%arg0: i32) -> (i32, i32) {
    %c0_i32 = arith.constant 0 : i32
    %c0_i32_0 = arith.constant 0 : i32
    %c0_i32_1 = arith.constant 0 : i32
    return %c0_i32, %c0_i32_0 : i32, i32
  }
  func.func @transform_8(%arg0: i32) -> (i32, i32, i32) {
    %c0_i32 = arith.constant 0 : i32
    %c0_i32_0 = arith.constant 0 : i32
    %c0_i32_1 = arith.constant 0 : i32
    return %arg0, %c0_i32, %c0_i32_0 : i32, i32, i32
  }
  func.func @transform_9(%arg0: i32) -> (i32, i32, i32) {
    %c0_i32 = arith.constant 0 : i32
    %c0_i32_0 = arith.constant 0 : i32
    %c0_i32_1 = arith.constant 0 : i32
    return %arg0, %c0_i32, %c0_i32_0 : i32, i32, i32
  }
}

</mosaic_0001>

<llo_original>
// kernel: tpu_custom_call.1
$region0: #{tpu_custom_call.1}
  #allocation0 [shape = 'u32[]', space=smem, size = 0x4, offset = 0x4, fixed_abs, tag = 'smem constant byte address 0x4 - core index']
  #allocation1 [shape = 'u32[144,128]{1,0:T(1,128)}', space=vmem, size = 0x12000, scoped, tag = 'internal scratch']
  %s0 = inlined_call_operand.hbm [shape: f32[2,8,32], index: 0, kind: input, shape index: {}]
  %s1 = inlined_call_operand.hbm [shape: f32[32,96], index: 1, kind: input, shape index: {}]
  %s2 = inlined_call_operand.vmem [shape: f32[1,96], index: 2, kind: input, shape index: {}]
  %s3 = inlined_call_operand.hbm [shape: f32[32,32], index: 3, kind: input, shape index: {}]
  %s4 = inlined_call_operand.vmem [shape: f32[1,32], index: 4, kind: input, shape index: {}]
  %s5 = inlined_call_operand.hbm [shape: f32[1,32], index: 5, kind: input, shape index: {}]
  %s6 = inlined_call_operand.hbm [shape: f32[1,32], index: 6, kind: input, shape index: {}]
  %s7 = inlined_call_operand.vmem [shape: f32[8,8], index: 7, kind: input, shape index: {}]
  %s8 = inlined_call_operand.vmem [shape: f32[2,1,8], index: 8, kind: input, shape index: {}]
  %s9 = inlined_call_operand.hbm [shape: f32[2,8,32], index: 9, kind: output, shape index: {}]
  %s10 = sld [smem:[#allocation0]]
  $region89: #{tpu_custom_call.1} parent=0
    _
  %s12 = ssub.s32 1, %s10
  %s13 = scalar_select 0, %s12, %s10
  $region1: #{tpu_custom_call.1} parent=0
    #allocation2 [shape = 'u8[8192]{0}', space=vmem, size = 0x2000, scoped, tag = 'input window, operand 0']
    #allocation3 [shape = 's32[2]{0}', space=sflag, size = 0x8, scoped, tag = 'scoped memory for tpu_custom_call.1']
    #allocation4 [shape = 's32[2]{0}', space=sflag, size = 0x8, scoped, tag = 'scoped memory for tpu_custom_call.1']
    #allocation5 [shape = 'u8[16384]{0}', space=vmem, size = 0x4000, scoped, tag = 'input window, operand 1, single buffered']
    #allocation6 [shape = 's32[1]{0}', space=sflag, size = 0x4, scoped, tag = 'scoped memory for tpu_custom_call.1']
    #allocation7 [shape = 'u8[16384]{0}', space=vmem, size = 0x4000, scoped, tag = 'input window, operand 3, single buffered']
    #allocation8 [shape = 'u8[512]{0}', space=vmem, size = 0x400, scoped, tag = 'input window, operand 5, single buffered']
    #allocation9 [shape = 's32[1]{0}', space=sflag, size = 0x4, scoped, tag = 'scoped memory for tpu_custom_call.1']
    #allocation10 [shape = 'u8[512]{0}', space=vmem, size = 0x400, scoped, tag = 'input window, operand 6, single buffered']
    #allocation11 [shape = 'u8[8192]{0}', space=vmem, size = 0x2000, scoped, tag = 'output window, operand 0']
    %14 = vsyncpa [#allocation3], 0
    %s15 = scalar_lea.sflag [#allocation3], 1
    %16 = vsyncpa %s15, 0
    %17 = vsyncpa [#allocation6], 0
    %18 = vsyncpa [#allocation9], 0
    %19 = vsyncpa [#allocation4], 0
    %s20 = scalar_lea.sflag [#allocation4], 1
    %21 = vsyncpa %s20, 0
    loop: start=0, step=1, limit=4
    $region2: #{tpu_custom_call.1} parent=1 // loop_pre_header
      _
    $region3: #{tpu_custom_call.1} parent=1 // loop_header
      %s23 = sphi 0, %s27
      %p24 = scmp.ge.s32.totalorder %s23, 4
      %s33 = sphi 0, %s35
      %s36 = sphi 0, %s33
      %s37 = sphi 0, %s36
      %s53 = sphi 0, %s37
      %s57 = sphi 0, %s57
      %s59 = sphi 0, %s57
      %s60 = sphi 0, %s59
      %s74 = sphi 0, %s60
      %s78 = sphi 0, %s78
      %s80 = sphi 0, %s78
      %s81 = sphi 0, %s80
      %s95 = sphi 0, %s81
      %s99 = sphi 0, %s99
      %s101 = sphi 0, %s99
      %s102 = sphi 0, %s101
      %s116 = sphi 0, %s102
      %s120 = sphi 0, %s120
      %s122 = sphi 0, %s120
      %s123 = sphi 0, %s122
      %s137 = sphi 0, %s123
      %s141 = sphi 0, %s141
      %s143 = sphi 0, %s141
      %s144 = sphi 0, %s143
      %s158 = sphi 0, %s144
      %s162 = sphi 0, %s162
      %s164 = sphi 0, %s162
      %s165 = sphi 0, %s164
      %s179 = sphi 0, %s165
      %s183 = sphi 0, %s183
      %s185 = sphi 0, %s183
      %s186 = sphi 0, %s185
      %s200 = sphi 0, %s186
      %s206 = sphi 0, %s208
      %s209 = sphi 0, %s206
      %s210 = sphi 0, %s209
      %s226 = sphi 0, %s210
      %s232 = sphi 0, %s234
      %s235 = sphi 0, %s232
      %s236 = sphi 0, %s235
      %s252 = sphi 0, %s236
    $region4: #{tpu_custom_call.1} parent=1 // loop_header_branch
      %26 = sbr.rel (%p24) target = $region8
    $region5: #{tpu_custom_call.1} parent=1 // loop_body
      %s28 = ssub.s32 %s23, 1
      %s29 = ssub.s32 %s23, 2
      %s30 = sadd.s32 %s23, 1
      %s31 = ssub.s32 %s23, %s30
      %p32 = scmp.eq.s32.totalorder %s31, 0
      %s34 = sadd.s32 %s33, 1
      %s35 = scalar_select %p32, %s33, %s34
      %p38 = pneg %p32
      %p39 = scmp.eq.s32.totalorder %s23, 1
      %p40 = por %p38, %p39
      %p41 = scmp.ne.s32.totalorder %s33, %s36
      %p42 = scmp.eq.s32.totalorder %s23, 0
      %p43 = por %p41, %p42
      %p44 = scmp.ne.s32.totalorder %s33, %s36
      %p45 = scmp.eq.s32.totalorder %s28, 1
      %p46 = por %p44, %p45
      %p47 = scmp.ne.s32.totalorder %s36, %s37
      %p48 = scmp.eq.s32.totalorder %s28, 0
      %p49 = por %p47, %p48
      %p50 = scmp.ne.s32.totalorder %s36, %s37
      %p51 = scmp.eq.s32.totalorder %s29, 1
      %p52 = por %p50, %p51
      %p54 = scmp.ne.s32.totalorder %s37, %s53
      %p55 = scmp.eq.s32.totalorder %s29, 0
      %p56 = por %p54, %p55
      %s58 = sadd.s32 %s57, 1
      %p61 = scmp.eq.s32.totalorder %s23, 1
      %p62 = scmp.ne.s32.totalorder %s57, %s59
      %p63 = scmp.eq.s32.totalorder %s23, 0
      %p64 = por %p62, %p63
      %p65 = scmp.ne.s32.totalorder %s57, %s59
      %p66 = scmp.eq.s32.totalorder %s28, 1
      %p67 = por %p65, %p66
      %p68 = scmp.ne.s32.totalorder %s59, %s60
      %p69 = scmp.eq.s32.totalorder %s28, 0
      %p70 = por %p68, %p69
      %p71 = scmp.ne.s32.totalorder %s59, %s60
      %p72 = scmp.eq.s32.totalorder %s29, 1
      %p73 = por %p71, %p72
      %p75 = scmp.ne.s32.totalorder %s60, %s74
      %p76 = scmp.eq.s32.totalorder %s29, 0
      %p77 = por %p75, %p76
      %s79 = sadd.s32 %s78, 1
      %p82 = scmp.eq.s32.totalorder %s23, 1
      %p83 = scmp.ne.s32.totalorder %s78, %s80
      %p84 = scmp.eq.s32.totalorder %s23, 0
      %p85 = por %p83, %p84
      %p86 = scmp.ne.s32.totalorder %s78, %s80
      %p87 = scmp.eq.s32.totalorder %s28, 1
      %p88 = por %p86, %p87
      %p89 = scmp.ne.s32.totalorder %s80, %s81
      %p90 = scmp.eq.s32.totalorder %s28, 0
      %p91 = por %p89, %p90
      %p92 = scmp.ne.s32.totalorder %s80, %s81
      %p93 = scmp.eq.s32.totalorder %s29, 1
      %p94 = por %p92, %p93
      %p96 = scmp.ne.s32.totalorder %s81, %s95
      %p97 = scmp.eq.s32.totalorder %s29, 0
      %p98 = por %p96, %p97
      %s100 = sadd.s32 %s99, 1
      %p103 = scmp.eq.s32.totalorder %s23, 1
      %p104 = scmp.ne.s32.totalorder %s99, %s101
      %p105 = scmp.eq.s32.totalorder %s23, 0
      %p106 = por %p104, %p105
      %p107 = scmp.ne.s32.totalorder %s99, %s101
      %p108 = scmp.eq.s32.totalorder %s28, 1
      %p109 = por %p107, %p108
      %p110 = scmp.ne.s32.totalorder %s101, %s102
      %p111 = scmp.eq.s32.totalorder %s28, 0
      %p112 = por %p110, %p111
      %p113 = scmp.ne.s32.totalorder %s101, %s102
      %p114 = scmp.eq.s32.totalorder %s29, 1
      %p115 = por %p113, %p114
      %p117 = scmp.ne.s32.totalorder %s102, %s116
      %p118 = scmp.eq.s32.totalorder %s29, 0
      %p119 = por %p117, %p118
      %s121 = sadd.s32 %s120, 1
      %p124 = scmp.eq.s32.totalorder %s23, 1
      %p125 = scmp.ne.s32.totalorder %s120, %s122
      %p126 = scmp.eq.s32.totalorder %s23, 0
      %p127 = por %p125, %p126
      %p128 = scmp.ne.s32.totalorder %s120, %s122
      %p129 = scmp.eq.s32.totalorder %s28, 1
      %p130 = por %p128, %p129
      %p131 = scmp.ne.s32.totalorder %s122, %s123
      %p132 = scmp.eq.s32.totalorder %s28, 0
      %p133 = por %p131, %p132
      %p134 = scmp.ne.s32.totalorder %s122, %s123
      %p135 = scmp.eq.s32.totalorder %s29, 1
      %p136 = por %p134, %p135
      %p138 = scmp.ne.s32.totalorder %s123, %s137
      %p139 = scmp.eq.s32.totalorder %s29, 0
      %p140 = por %p138, %p139
      %s142 = sadd.s32 %s141, 1
      %p145 = scmp.eq.s32.totalorder %s23, 1
      %p146 = scmp.ne.s32.totalorder %s141, %s143
      %p147 = scmp.eq.s32.totalorder %s23, 0
      %p148 = por %p146, %p147
      %p149 = scmp.ne.s32.totalorder %s141, %s143
      %p150 = scmp.eq.s32.totalorder %s28, 1
      %p151 = por %p149, %p150
      %p152 = scmp.ne.s32.totalorder %s143, %s144
      %p153 = scmp.eq.s32.totalorder %s28, 0
      %p154 = por %p152, %p153
      %p155 = scmp.ne.s32.totalorder %s143, %s144
      %p156 = scmp.eq.s32.totalorder %s29, 1
      %p157 = por %p155, %p156
      %p159 = scmp.ne.s32.totalorder %s144, %s158
      %p160 = scmp.eq.s32.totalorder %s29, 0
      %p161 = por %p159, %p160
      %s163 = sadd.s32 %s162, 1
      %p166 = scmp.eq.s32.totalorder %s23, 1
      %p167 = scmp.ne.s32.totalorder %s162, %s164
      %p168 = scmp.eq.s32.totalorder %s23, 0
      %p169 = por %p167, %p168
      %p170 = scmp.ne.s32.totalorder %s162, %s164
      %p171 = scmp.eq.s32.totalorder %s28, 1
      %p172 = por %p170, %p171
      %p173 = scmp.ne.s32.totalorder %s164, %s165
      %p174 = scmp.eq.s32.totalorder %s28, 0
      %p175 = por %p173, %p174
      %p176 = scmp.ne.s32.totalorder %s164, %s165
      %p177 = scmp.eq.s32.totalorder %s29, 1
      %p178 = por %p176, %p177
      %p180 = scmp.ne.s32.totalorder %s165, %s179
      %p181 = scmp.eq.s32.totalorder %s29, 0
      %p182 = por %p180, %p181
      %s184 = sadd.s32 %s183, 1
      %p187 = scmp.eq.s32.totalorder %s23, 1
      %p188 = scmp.ne.s32.totalorder %s183, %s185
      %p189 = scmp.eq.s32.totalorder %s23, 0
      %p190 = por %p188, %p189
      %p191 = scmp.ne.s32.totalorder %s183, %s185
      %p192 = scmp.eq.s32.totalorder %s28, 1
      %p193 = por %p191, %p192
      %p194 = scmp.ne.s32.totalorder %s185, %s186
      %p195 = scmp.eq.s32.totalorder %s28, 0
      %p196 = por %p194, %p195
      %p197 = scmp.ne.s32.totalorder %s185, %s186
      %p198 = scmp.eq.s32.totalorder %s29, 1
      %p199 = por %p197, %p198
      %p201 = scmp.ne.s32.totalorder %s186, %s200
      %p202 = scmp.eq.s32.totalorder %s29, 0
      %p203 = por %p201, %p202
      %s204 = ssub.s32 %s23, %s30
      %p205 = scmp.eq.s32.totalorder %s204, 0
      %s207 = sadd.s32 %s206, 1
      %s208 = scalar_select %p205, %s206, %s207
      %p211 = pneg %p205
      %p212 = scmp.eq.s32.totalorder %s23, 1
      %p213 = por %p211, %p212
      %p214 = scmp.ne.s32.totalorder %s206, %s209
      %p215 = scmp.eq.s32.totalorder %s23, 0
      %p216 = por %p214, %p215
      %p217 = scmp.ne.s32.totalorder %s206, %s209
      %p218 = scmp.eq.s32.totalorder %s28, 1
      %p219 = por %p217, %p218
      %p220 = scmp.ne.s32.totalorder %s209, %s210
      %p221 = scmp.eq.s32.totalorder %s28, 0
      %p222 = por %p220, %p221
      %p223 = scmp.ne.s32.totalorder %s209, %s210
      %p224 = scmp.eq.s32.totalorder %s29, 1
      %p225 = por %p223, %p224
      %p227 = scmp.ne.s32.totalorder %s210, %s226
      %p228 = scmp.eq.s32.totalorder %s29, 0
      %p229 = por %p227, %p228
      %s230 = ssub.s32 %s23, %s30
      %p231 = scmp.eq.s32.totalorder %s230, 0
      %s233 = sadd.s32 %s232, 1
      %s234 = scalar_select %p231, %s232, %s233
      %p237 = pneg %p231
      %p238 = scmp.eq.s32.totalorder %s23, 1
      %p239 = por %p237, %p238
      %p240 = scmp.ne.s32.totalorder %s232, %s235
      %p241 = scmp.eq.s32.totalorder %s23, 0
      %p242 = por %p240, %p241
      %p243 = scmp.ne.s32.totalorder %s232, %s235
      %p244 = scmp.eq.s32.totalorder %s28, 1
      %p245 = por %p243, %p244
      %p246 = scmp.ne.s32.totalorder %s235, %s236
      %p247 = scmp.eq.s32.totalorder %s28, 0
      %p248 = por %p246, %p247
      %p249 = scmp.ne.s32.totalorder %s235, %s236
      %p250 = scmp.eq.s32.totalorder %s29, 1
      %p251 = por %p249, %p250
      %p253 = scmp.ne.s32.totalorder %s236, %s252
      %p254 = scmp.eq.s32.totalorder %s29, 0
      %p255 = por %p253, %p254
      %p256 = scmp.le.s32.totalorder 1, %s23
      %p257 = scmp.lt.s32.totalorder %s23, 3
      %p258 = pnand %p256, %p257
      %p259 = pneg %p258
      // Predicated region
      $region9: #{tpu_custom_call.1} parent=5 // pred_check
        _
      $region10: #{tpu_custom_call.1} parent=5 // pred_check_branch
        %261 = sbr.rel (%p258) target = $region12
      $region11: #{tpu_custom_call.1} parent=5 // pred_region
        %s262 = ssub.s32 %s23, 1
        // Predicated region
        $region13: #{tpu_custom_call.1} parent=11 // pred_check
          %p263 = pneg %p70
        $region14: #{tpu_custom_call.1} parent=11 // pred_check_branch
          %265 = sbr.rel (%p263) target = $region16
        $region15: #{tpu_custom_call.1} parent=11 // pred_region
          %s267 = ssub.s32 512, 512
          %268 = vsyncadd [#allocation6], %s267
          %s269 = sshll.u32 [#allocation5], 4
          %s270 = int_to_ptr.vmem [resolvable:$true] %s269
          %275 = dma.hbm_to_vmem [thread:$0]  %s1, 512, %s270, [#allocation6], 128, 128, 8
        $region16: #{tpu_custom_call.1} parent=11 // pred_fallthru
          _
        // Predicated region
        $region17: #{tpu_custom_call.1} parent=11 // pred_check
          %p276 = pneg %p91
        $region18: #{tpu_custom_call.1} parent=11 // pred_check_branch
          %278 = sbr.rel (%p276) target = $region20
        $region19: #{tpu_custom_call.1} parent=11 // pred_region
          _
        $region20: #{tpu_custom_call.1} parent=11 // pred_fallthru
          _
        // Predicated region
        $region21: #{tpu_custom_call.1} parent=11 // pred_check
          %p279 = pneg %p112
        $region22: #{tpu_custom_call.1} parent=11 // pred_check_branch
          %281 = sbr.rel (%p279) target = $region24
        $region23: #{tpu_custom_call.1} parent=11 // pred_region
          %s283 = ssub.s32 512, 512
          %284 = vsyncadd [#allocation6], %s283
          %s285 = sshll.u32 [#allocation7], 4
          %s286 = int_to_ptr.vmem [resolvable:$true] %s285
          %291 = dma.hbm_to_vmem [thread:$0]  %s3, 512, %s286, [#allocation6], 128, 128, 8
        $region24: #{tpu_custom_call.1} parent=11 // pred_fallthru
          _
        // Predicated region
        $region25: #{tpu_custom_call.1} parent=11 // pred_check
          %p292 = pneg %p133
        $region26: #{tpu_custom_call.1} parent=11 // pred_check_branch
          %294 = sbr.rel (%p292) target = $region28
        $region27: #{tpu_custom_call.1} parent=11 // pred_region
          _
        $region28: #{tpu_custom_call.1} parent=11 // pred_fallthru
          _
        // Predicated region
        $region29: #{tpu_custom_call.1} parent=11 // pred_check
          %p295 = pneg %p154
        $region30: #{tpu_custom_call.1} parent=11 // pred_check_branch
          %297 = sbr.rel (%p295) target = $region32
        $region31: #{tpu_custom_call.1} parent=11 // pred_region
          %s299 = ssub.s32 16, 16
          %300 = vsyncadd [#allocation9], %s299
          %s302 = sshll.u32 [#allocation8], 4
          %s303 = int_to_ptr.vmem [resolvable:$true] %s302
          %305 = dma.hbm_to_vmem [thread:$0]  %s5, 16, %s303, [#allocation9]
        $region32: #{tpu_custom_call.1} parent=11 // pred_fallthru
          _
        // Predicated region
        $region33: #{tpu_custom_call.1} parent=11 // pred_check
          %p306 = pneg %p175
        $region34: #{tpu_custom_call.1} parent=11 // pred_check_branch
          %308 = sbr.rel (%p306) target = $region36
        $region35: #{tpu_custom_call.1} parent=11 // pred_region
          %s310 = ssub.s32 16, 16
          %311 = vsyncadd [#allocation9], %s310
          %s313 = sshll.u32 [#allocation10], 4
          %s314 = int_to_ptr.vmem [resolvable:$true] %s313
          %316 = dma.hbm_to_vmem [thread:$0]  %s6, 16, %s314, [#allocation9]
        $region36: #{tpu_custom_call.1} parent=11 // pred_fallthru
          _
        // Predicated region
        $region37: #{tpu_custom_call.1} parent=11 // pred_check
          %p317 = pneg %p196
        $region38: #{tpu_custom_call.1} parent=11 // pred_check_branch
          %319 = sbr.rel (%p317) target = $region40
        $region39: #{tpu_custom_call.1} parent=11 // pred_region
          _
        $region40: #{tpu_custom_call.1} parent=11 // pred_fallthru
          _
      $region12: #{tpu_custom_call.1} parent=5 // pred_fallthru
        _
      %p320 = scmp.lt.s32.totalorder %s23, 2
      // Predicated region
      $region41: #{tpu_custom_call.1} parent=5 // pred_check
        %p321 = pneg %p320
      $region42: #{tpu_custom_call.1} parent=5 // pred_check_branch
        %323 = sbr.rel (%p321) target = $region44
      $region43: #{tpu_custom_call.1} parent=5 // pred_region
        // Predicated region
        $region45: #{tpu_custom_call.1} parent=43 // pred_check
          %p324 = pneg %p43
        $region46: #{tpu_custom_call.1} parent=43 // pred_check_branch
          %326 = sbr.rel (%p324) target = $region48
        $region47: #{tpu_custom_call.1} parent=43 // pred_region
          %s327 = sand.u32 %s33, 1
          %s328 = scalar_lea.sflag [#allocation3], %s327
          %s329 = sand.u32 %s33, 1
          %s330 = smul.addr %s329, 8
          %s331 = scalar_lea.vmem [#allocation2], %s330
          %s333 = ssub.s32 128, 128
          %334 = vsyncadd %s328, %s333
          %s335 = smul.addr %s23, 128
          %s336 = scalar_lea.hbm %s0, %s335
          %s338 = sshll.u32 %s331, 4
          %s339 = int_to_ptr.vmem [resolvable:$true] %s338
          %341 = dma.hbm_to_vmem [thread:$0]  %s336, 128, %s339, %s328
        $region48: #{tpu_custom_call.1} parent=43 // pred_fallthru
          _
        // Predicated region
        $region49: #{tpu_custom_call.1} parent=43 // pred_check
          %p342 = pneg %p216
        $region50: #{tpu_custom_call.1} parent=43 // pred_check_branch
          %344 = sbr.rel (%p342) target = $region52
        $region51: #{tpu_custom_call.1} parent=43 // pred_region
          %p345 = scmp.lt.s32.totalorder %s23, 1
          %s346 = scalar_select %p345, %s23, 1
          %s347 = scalar_lea.vmem %s8, %s346
        $region52: #{tpu_custom_call.1} parent=43 // pred_fallthru
          _
      $region44: #{tpu_custom_call.1} parent=5 // pred_fallthru
        _
      %p348 = scmp.le.s32.totalorder 1, %s23
      %p349 = scmp.lt.s32.totalorder %s23, 3
      %p350 = pnand %p348, %p349
      %p351 = pneg %p350
      // Predicated region
      $region53: #{tpu_custom_call.1} parent=5 // pred_check
        _
      $region54: #{tpu_custom_call.1} parent=5 // pred_check_branch
        %353 = sbr.rel (%p350) target = $region56
      $region55: #{tpu_custom_call.1} parent=5 // pred_region
        %s354 = ssub.s32 %s23, 1
        %s355 = sand.u32 %s36, 1
        %s356 = scalar_lea.sflag [#allocation3], %s355
        %s357 = sand.u32 %s36, 1
        %s358 = smul.addr %s357, 8
        %s359 = scalar_lea.vmem [#allocation2], %s358
        // Predicated region
        $region57: #{tpu_custom_call.1} parent=55 // pred_check
          %p360 = pneg %p49
        $region58: #{tpu_custom_call.1} parent=55 // pred_check_branch
          %362 = sbr.rel (%p360) target = $region60
        $region59: #{tpu_custom_call.1} parent=55 // pred_region
          %363 = dma.done %s356, 128
        $region60: #{tpu_custom_call.1} parent=55 // pred_fallthru
          _
        // Predicated region
        $region61: #{tpu_custom_call.1} parent=55 // pred_check
          %p364 = pneg %p70
        $region62: #{tpu_custom_call.1} parent=55 // pred_check_branch
          %366 = sbr.rel (%p364) target = $region64
        $region63: #{tpu_custom_call.1} parent=55 // pred_region
          %367 = dma.done [#allocation6], 512
        $region64: #{tpu_custom_call.1} parent=55 // pred_fallthru
          _
        // Predicated region
        $region65: #{tpu_custom_call.1} parent=55 // pred_check
          %p368 = pneg %p112
        $region66: #{tpu_custom_call.1} parent=55 // pred_check_branch
          %370 = sbr.rel (%p368) target = $region68
        $region67: #{tpu_custom_call.1} parent=55 // pred_region
          %371 = dma.done [#allocation6], 512
        $region68: #{tpu_custom_call.1} parent=55 // pred_fallthru
          _
        // Predicated region
        $region69: #{tpu_custom_call.1} parent=55 // pred_check
          %p372 = pneg %p154
        $region70: #{tpu_custom_call.1} parent=55 // pred_check_branch
          %374 = sbr.rel (%p372) target = $region72
        $region71: #{tpu_custom_call.1} parent=55 // pred_region
          %375 = dma.done [#allocation9], 16
        $region72: #{tpu_custom_call.1} parent=55 // pred_fallthru
          _
        // Predicated region
        $region73: #{tpu_custom_call.1} parent=55 // pred_check
          %p376 = pneg %p175
        $region74: #{tpu_custom_call.1} parent=55 // pred_check_branch
          %378 = sbr.rel (%p376) target = $region76
        $region75: #{tpu_custom_call.1} parent=55 // pred_region
          %379 = dma.done [#allocation9], 16
        $region76: #{tpu_custom_call.1} parent=55 // pred_fallthru
          _
        %s380 = sand.u32 %s36, 1
        %s381 = scalar_lea.sflag [#allocation3], %s380
        %s382 = sand.u32 %s36, 1
        %s383 = smul.addr %s382, 8
        %s384 = scalar_lea.vmem [#allocation2], %s383
        %p385 = pneg %p49
        %p386 = pneg %p46
        %p387 = pneg %p70
        %p388 = pneg %p67
        %p389 = pneg %p91
        %p390 = pneg %p88
        %p391 = pneg %p112
        %p392 = pneg %p109
        %p393 = pneg %p133
        %p394 = pneg %p130
        %p395 = pneg %p154
        %p396 = pneg %p151
        %p397 = pneg %p175
        %p398 = pneg %p172
        %p399 = pneg %p196
        %p400 = pneg %p193
        %p401 = scmp.lt.s32.totalorder %s28, 1
        %s402 = scalar_select %p401, %s28, 1
        %s403 = scalar_lea.vmem %s8, %s402
        %p404 = pneg %p222
        %p405 = pneg %p219
        %p406 = pneg %p248
        %p407 = pneg %p245
        %s408 = sand.u32 %s235, 1
        %s409 = scalar_lea.sflag [#allocation4], %s408
        %s410 = sand.u32 %s235, 1
        %s411 = smul.addr %s410, 8
        %s412 = scalar_lea.vmem [#allocation11], %s411
        %p413 = scmp.lt.s32.totalorder %s28, 1
        %s414 = scalar_select %p413, %s28, 1
        %s415 = scalar_lea.vmem %s8, %s414
        %v417 = vld [vmem:[%s359] sm:$0xff]
        %v418 = vpack.c.bf16 %v417, %v417
        %v419 = vld [vmem:[#allocation5] sm:$0xff]
        %v420 = vld [vmem:[#allocation5 + $0x8] sm:$0xff]
        %v421 = vld [vmem:[#allocation5 + $0x10] sm:$0xff]
        %v422 = vld [vmem:[#allocation5 + $0x18] sm:$0xff]
        %v423 = vpack.c.bf16 %v420, %v419
        %v424 = vpack.c.bf16 %v422, %v421
        %v425 = vld [vmem:[%s2] sm:$0x1]
        %v427 = vlaneseq
        %v428 = vshrl.u32 %v427, 7
        %v429 = vsub.s32 0, %v428
        %v430 = vrot.slane %v425, %v429
        %vm432 = vcmask 261120
        %v434 = vsel %vm432, %v418, 0
        %436 = vmatprep.subr.bf16.mxu0 0
        %437 = vmatpush1.bf16.msra.mxu0 0
        %438 = vmatprep.subr.bf16.mxu0 0
        %439 = vmatpush1.bf16.msra.mxu0 0
        %440 = vmatprep.subr.bf16.mxu0 0
        %441 = vmatpush1.bf16.msra.mxu0 0
        %442 = vmatprep.subr.bf16.mxu0 0
        %443 = vmatpush1.bf16.msra.mxu0 0
        %444 = vmatprep.subr.bf16.mxu0 0
        %445 = vmatpush1.bf16.msra.mxu0 0
        %446 = vmatprep.subr.bf16.mxu0 0
        %447 = vmatpush1.bf16.msra.mxu0 0
        %448 = vmatprep.subr.bf16.mxu0 0
        %449 = vmatpush1.bf16.msra.mxu0 %v424
        %450 = vmatprep.subr.bf16.mxu0 0
        %451 = vmatpush1.bf16.msra.mxu0 %v423
        %452 = vmatprep.subr.bf16.mxu0 0
        %453 = vmatpush2.bf16.msra.mxu0 0
        %454 = vmatprep.subr.bf16.mxu0 0
        %455 = vmatpush2.bf16.msra.mxu0 0
        %456 = vmatprep.subr.bf16.mxu0 0
        %457 = vmatpush2.bf16.msra.mxu0 0
        %458 = vmatprep.subr.bf16.mxu0 0
        %459 = vmatpush2.bf16.msra.mxu0 0
        %460 = vmatprep.subr.bf16.mxu0 0
        %461 = vmatpush2.bf16.msra.mxu0 0
        %462 = vmatprep.subr.bf16.mxu0 0
        %463 = vmatpush2.bf16.msra.mxu0 0
        %464 = vmatprep.subr.bf16.mxu0 0
        %465 = vmatpush2.bf16.msra.mxu0 0
        %466 = vmatprep.subr.bf16.mxu0 0
        %467 = vmatpush2.bf16.msra.mxu0 0
        %468 = vmatprep.mubr.bf16.mxu0 0
        %469 = vmatmul.mubr.bf16.gmra.mxu0 %v434
        %v470 = vpop.f32.mrf.mxu0
        %v471 = vadd.f32 %v430, %v470
        %v472 = vpop.f32.mrf.mxu0
        %v473 = vpop.f32.mrf.mxu0
        %v474 = vpop.f32.mrf.mxu0
        %475 = vdwg.mxu0
        %v476 = vld [vmem:[%s7] sm:$0xff]
        %v477 = vld [vmem:[%s415] sm:$0x1]
        %v479 = vlaneseq
        %v480 = vshrl.u32 %v479, 7
        %v481 = vsub.s32 0, %v480
        %v482 = vrot.slane %v477, %v481
        %v484 = vadd.f32 %v476, %v482
        %v485 = vpack.c.bf16 %v471, %v471
        %487 = vrot.lane.b32.xlu0 %v485, 96
        %v488 = vpop.permute.xlu0 %487
        %vm489 = vcmask 64512
        %v491 = vsel %vm489, %v485, 0
        %v494 = vsel %vm489, %v488, 0
        %496 = vmatprep.subr.bf16.mxu0 0
        %497 = vmatpush1.bf16.xpose.msra.mxu0 0
        %498 = vmatprep.subr.bf16.mxu0 0
        %499 = vmatpush1.bf16.xpose.msra.mxu0 0
        %500 = vmatprep.subr.bf16.mxu0 0
        %501 = vmatpush1.bf16.xpose.msra.mxu0 0
        %502 = vmatprep.subr.bf16.mxu0 0
        %503 = vmatpush1.bf16.xpose.msra.mxu0 0
        %504 = vmatprep.subr.bf16.mxu0 0
        %505 = vmatpush1.bf16.xpose.msra.mxu0 0
        %506 = vmatprep.subr.bf16.mxu0 0
        %507 = vmatpush1.bf16.xpose.msra.mxu0 0
        %508 = vmatprep.subr.bf16.mxu0 0
        %509 = vmatpush1.bf16.xpose.msra.mxu0 0
        %510 = vmatprep.subr.bf16.mxu0 0
        %511 = vmatpush1.bf16.xpose.msra.mxu0 %v494
        %512 = vmatprep.subr.bf16.mxu0 0
        %513 = vmatpush2.bf16.xpose.msra.mxu0 0
        %514 = vmatprep.subr.bf16.mxu0 0
        %515 = vmatpush2.bf16.xpose.msra.mxu0 0
        %516 = vmatprep.subr.bf16.mxu0 0
        %517 = vmatpush2.bf16.xpose.msra.mxu0 0
        %518 = vmatprep.subr.bf16.mxu0 0
        %519 = vmatpush2.bf16.xpose.msra.mxu0 0
        %520 = vmatprep.subr.bf16.mxu0 0
        %521 = vmatpush2.bf16.xpose.msra.mxu0 0
        %522 = vmatprep.subr.bf16.mxu0 0
        %523 = vmatpush2.bf16.xpose.msra.mxu0 0
        %524 = vmatprep.subr.bf16.mxu0 0
        %525 = vmatpush2.bf16.xpose.msra.mxu0 0
        %526 = vmatprep.subr.bf16.mxu0 0
        %527 = vmatpush2.bf16.xpose.msra.mxu0 0
        %528 = vmatprep.mubr.bf16.mxu0 0
        %529 = vmatmul.mubr.bf16.gmra.mxu0 %v491
        %v530 = vpop.f32.mrf.mxu0
        %v531 = vadd.f32 0.0, %v530
        %v532 = vpop.f32.mrf.mxu0
        %v533 = vpop.f32.mrf.mxu0
        %v534 = vpop.f32.mrf.mxu0
        %535 = vdwg.mxu0
        %v536 = vmul.f32 %v531, 0.35355338
        %v537 = vadd.f32 %v536, %v484
        %v538 = vsel %vm489, %v537, -inf
        %539 = vmax.xlane.f32.xlu0 %v538
        %v540 = vpop.xlane.xlu0 %539
        %v541 = vsub.f32 %v537, %v540
        %v542 = vmul.f32 %v541, 1.442695
        %v543 = vpow.pop %v542
        %v544 = vsel %vm489, %v543, 0.0
        %545 = vadd.xlane.f32.xlu0 %v544
        %v546 = vpop.xlane.xlu0 %545
        %v547 = vrcp.pop %v546
        %v548 = vmul.f32 %v543, %v547
        %v549 = vpack.c.bf16 %v548, %v548
        %550 = vrot.lane.b32.xlu0 %v485, 64
        %v551 = vpop.permute.xlu0 %550
        %v553 = vsel %vm489, %v549, 0
        %vm555 = vcmask 1043456
        %v557 = vsel %vm555, %v551, 0
        %559 = vmatprep.subr.bf16.mxu0 0
        %560 = vmatpush1.bf16.msra.mxu0 0
        %561 = vmatprep.subr.bf16.mxu0 0
        %562 = vmatpush1.bf16.msra.mxu0 0
        %563 = vmatprep.subr.bf16.mxu0 0
        %564 = vmatpush1.bf16.msra.mxu0 0
        %565 = vmatprep.subr.bf16.mxu0 0
        %566 = vmatpush1.bf16.msra.mxu0 0
        %567 = vmatprep.subr.bf16.mxu0 0
        %568 = vmatpush1.bf16.msra.mxu0 0
        %569 = vmatprep.subr.bf16.mxu0 0
        %570 = vmatpush1.bf16.msra.mxu0 0
        %571 = vmatprep.subr.bf16.mxu0 0
        %572 = vmatpush1.bf16.msra.mxu0 0
        %573 = vmatprep.subr.bf16.mxu0 0
        %574 = vmatpush1.bf16.msra.mxu0 %v557
        %575 = vmatprep.subr.bf16.mxu0 0
        %576 = vmatpush2.bf16.msra.mxu0 0
        %577 = vmatprep.subr.bf16.mxu0 0
        %578 = vmatpush2.bf16.msra.mxu0 0
        %579 = vmatprep.subr.bf16.mxu0 0
        %580 = vmatpush2.bf16.msra.mxu0 0
        %581 = vmatprep.subr.bf16.mxu0 0
        %582 = vmatpush2.bf16.msra.mxu0 0
        %583 = vmatprep.subr.bf16.mxu0 0
        %584 = vmatpush2.bf16.msra.mxu0 0
        %585 = vmatprep.subr.bf16.mxu0 0
        %586 = vmatpush2.bf16.msra.mxu0 0
        %587 = vmatprep.subr.bf16.mxu0 0
        %588 = vmatpush2.bf16.msra.mxu0 0
        %589 = vmatprep.subr.bf16.mxu0 0
        %590 = vmatpush2.bf16.msra.mxu0 0
        %591 = vmatprep.mubr.bf16.mxu0 0
        %592 = vmatmul.mubr.bf16.gmra.mxu0 %v553
        %v593 = vpop.f32.mrf.mxu0
        %v594 = vadd.f32 0.0, %v593
        %v595 = vpop.f32.mrf.mxu0
        %v596 = vpop.f32.mrf.mxu0
        %v597 = vpop.f32.mrf.mxu0
        %598 = vdwg.mxu0
        %599 = vrot.lane.b32.xlu0 %v485, 120
        %v600 = vpop.permute.xlu0 %599
        %601 = vrot.lane.b32.xlu0 %v485, 88
        %v602 = vpop.permute.xlu0 %601
        %v604 = vsel %vm489, %v600, 0
        %v607 = vsel %vm489, %v602, 0
        %609 = vmatprep.subr.bf16.mxu0 0
        %610 = vmatpush1.bf16.xpose.msra.mxu0 0
        %611 = vmatprep.subr.bf16.mxu0 0
        %612 = vmatpush1.bf16.xpose.msra.mxu0 0
        %613 = vmatprep.subr.bf16.mxu0 0
        %614 = vmatpush1.bf16.xpose.msra.mxu0 0
        %615 = vmatprep.subr.bf16.mxu0 0
        %616 = vmatpush1.bf16.xpose.msra.mxu0 0
        %617 = vmatprep.subr.bf16.mxu0 0
        %618 = vmatpush1.bf16.xpose.msra.mxu0 0
        %619 = vmatprep.subr.bf16.mxu0 0
        %620 = vmatpush1.bf16.xpose.msra.mxu0 0
        %621 = vmatprep.subr.bf16.mxu0 0
        %622 = vmatpush1.bf16.xpose.msra.mxu0 0
        %623 = vmatprep.subr.bf16.mxu0 0
        %624 = vmatpush1.bf16.xpose.msra.mxu0 %v607
        %625 = vmatprep.subr.bf16.mxu0 0
        %626 = vmatpush2.bf16.xpose.msra.mxu0 0
        %627 = vmatprep.subr.bf16.mxu0 0
        %628 = vmatpush2.bf16.xpose.msra.mxu0 0
        %629 = vmatprep.subr.bf16.mxu0 0
        %630 = vmatpush2.bf16.xpose.msra.mxu0 0
        %631 = vmatprep.subr.bf16.mxu0 0
        %632 = vmatpush2.bf16.xpose.msra.mxu0 0
        %633 = vmatprep.subr.bf16.mxu0 0
        %634 = vmatpush2.bf16.xpose.msra.mxu0 0
        %635 = vmatprep.subr.bf16.mxu0 0
        %636 = vmatpush2.bf16.xpose.msra.mxu0 0
        %637 = vmatprep.subr.bf16.mxu0 0
        %638 = vmatpush2.bf16.xpose.msra.mxu0 0
        %639 = vmatprep.subr.bf16.mxu0 0
        %640 = vmatpush2.bf16.xpose.msra.mxu0 0
        %641 = vmatprep.mubr.bf16.mxu0 0
        %642 = vmatmul.mubr.bf16.gmra.mxu0 %v604
        %v643 = vpop.f32.mrf.mxu0
        %v644 = vadd.f32 0.0, %v643
        %v645 = vpop.f32.mrf.mxu0
        %v646 = vpop.f32.mrf.mxu0
        %v647 = vpop.f32.mrf.mxu0
        %648 = vdwg.mxu0
        %v649 = vmul.f32 %v644, 0.35355338
        %v650 = vadd.f32 %v649, %v484
        %v651 = vsel %vm489, %v650, -inf
        %652 = vmax.xlane.f32.xlu0 %v651
        %v653 = vpop.xlane.xlu0 %652
        %v654 = vsub.f32 %v650, %v653
        %v655 = vmul.f32 %v654, 1.442695
        %v656 = vpow.pop %v655
        %v657 = vsel %vm489, %v656, 0.0
        %658 = vadd.xlane.f32.xlu0 %v657
        %v659 = vpop.xlane.xlu0 %658
        %v660 = vrcp.pop %v659
        %v661 = vmul.f32 %v656, %v660
        %v662 = vpack.c.bf16 %v661, %v661
        %663 = vrot.lane.b32.xlu0 %v485, 56
        %v664 = vpop.permute.xlu0 %663
        %v666 = vsel %vm489, %v662, 0
        %v669 = vsel %vm555, %v664, 0
        %671 = vmatprep.subr.bf16.mxu0 0
        %672 = vmatpush1.bf16.msra.mxu0 0
        %673 = vmatprep.subr.bf16.mxu0 0
        %674 = vmatpush1.bf16.msra.mxu0 0
        %675 = vmatprep.subr.bf16.mxu0 0
        %676 = vmatpush1.bf16.msra.mxu0 0
        %677 = vmatprep.subr.bf16.mxu0 0
        %678 = vmatpush1.bf16.msra.mxu0 0
        %679 = vmatprep.subr.bf16.mxu0 0
        %680 = vmatpush1.bf16.msra.mxu0 0
        %681 = vmatprep.subr.bf16.mxu0 0
        %682 = vmatpush1.bf16.msra.mxu0 0
        %683 = vmatprep.subr.bf16.mxu0 0
        %684 = vmatpush1.bf16.msra.mxu0 0
        %685 = vmatprep.subr.bf16.mxu0 0
        %686 = vmatpush1.bf16.msra.mxu0 %v669
        %687 = vmatprep.subr.bf16.mxu0 0
        %688 = vmatpush2.bf16.msra.mxu0 0
        %689 = vmatprep.subr.bf16.mxu0 0
        %690 = vmatpush2.bf16.msra.mxu0 0
        %691 = vmatprep.subr.bf16.mxu0 0
        %692 = vmatpush2.bf16.msra.mxu0 0
        %693 = vmatprep.subr.bf16.mxu0 0
        %694 = vmatpush2.bf16.msra.mxu0 0
        %695 = vmatprep.subr.bf16.mxu0 0
        %696 = vmatpush2.bf16.msra.mxu0 0
        %697 = vmatprep.subr.bf16.mxu0 0
        %698 = vmatpush2.bf16.msra.mxu0 0
        %699 = vmatprep.subr.bf16.mxu0 0
        %700 = vmatpush2.bf16.msra.mxu0 0
        %701 = vmatprep.subr.bf16.mxu0 0
        %702 = vmatpush2.bf16.msra.mxu0 0
        %703 = vmatprep.mubr.bf16.mxu0 0
        %704 = vmatmul.mubr.bf16.gmra.mxu0 %v666
        %v705 = vpop.f32.mrf.mxu0
        %v706 = vadd.f32 0.0, %v705
        %v707 = vpop.f32.mrf.mxu0
        %v708 = vpop.f32.mrf.mxu0
        %v709 = vpop.f32.mrf.mxu0
        %710 = vdwg.mxu0
        %711 = vrot.lane.b32.xlu0 %v485, 112
        %v712 = vpop.permute.xlu0 %711
        %713 = vrot.lane.b32.xlu0 %v485, 80
        %v714 = vpop.permute.xlu0 %713
        %v716 = vsel %vm489, %v712, 0
        %v719 = vsel %vm489, %v714, 0
        %721 = vmatprep.subr.bf16.mxu0 0
        %722 = vmatpush1.bf16.xpose.msra.mxu0 0
        %723 = vmatprep.subr.bf16.mxu0 0
        %724 = vmatpush1.bf16.xpose.msra.mxu0 0
        %725 = vmatprep.subr.bf16.mxu0 0
        %726 = vmatpush1.bf16.xpose.msra.mxu0 0
        %727 = vmatprep.subr.bf16.mxu0 0
        %728 = vmatpush1.bf16.xpose.msra.mxu0 0
        %729 = vmatprep.subr.bf16.mxu0 0
        %730 = vmatpush1.bf16.xpose.msra.mxu0 0
        %731 = vmatprep.subr.bf16.mxu0 0
        %732 = vmatpush1.bf16.xpose.msra.mxu0 0
        %733 = vmatprep.subr.bf16.mxu0 0
        %734 = vmatpush1.bf16.xpose.msra.mxu0 0
        %735 = vmatprep.subr.bf16.mxu0 0
        %736 = vmatpush1.bf16.xpose.msra.mxu0 %v719
        %737 = vmatprep.subr.bf16.mxu0 0
        %738 = vmatpush2.bf16.xpose.msra.mxu0 0
        %739 = vmatprep.subr.bf16.mxu0 0
        %740 = vmatpush2.bf16.xpose.msra.mxu0 0
        %741 = vmatprep.subr.bf16.mxu0 0
        %742 = vmatpush2.bf16.xpose.msra.mxu0 0
        %743 = vmatprep.subr.bf16.mxu0 0
        %744 = vmatpush2.bf16.xpose.msra.mxu0 0
        %745 = vmatprep.subr.bf16.mxu0 0
        %746 = vmatpush2.bf16.xpose.msra.mxu0 0
        %747 = vmatprep.subr.bf16.mxu0 0
        %748 = vmatpush2.bf16.xpose.msra.mxu0 0
        %749 = vmatprep.subr.bf16.mxu0 0
        %750 = vmatpush2.bf16.xpose.msra.mxu0 0
        %751 = vmatprep.subr.bf16.mxu0 0
        %752 = vmatpush2.bf16.xpose.msra.mxu0 0
        %753 = vmatprep.mubr.bf16.mxu0 0
        %754 = vmatmul.mubr.bf16.gmra.mxu0 %v716
        %v755 = vpop.f32.mrf.mxu0
        %v756 = vadd.f32 0.0, %v755
        %v757 = vpop.f32.mrf.mxu0
        %v758 = vpop.f32.mrf.mxu0
        %v759 = vpop.f32.mrf.mxu0
        %760 = vdwg.mxu0
        %v761 = vmul.f32 %v756, 0.35355338
        %v762 = vadd.f32 %v761, %v484
        %v763 = vsel %vm489, %v762, -inf
        %764 = vmax.xlane.f32.xlu0 %v763
        %v765 = vpop.xlane.xlu0 %764
        %v766 = vsub.f32 %v762, %v765
        %v767 = vmul.f32 %v766, 1.442695
        %v768 = vpow.pop %v767
        %v769 = vsel %vm489, %v768, 0.0
        %770 = vadd.xlane.f32.xlu0 %v769
        %v771 = vpop.xlane.xlu0 %770
        %v772 = vrcp.pop %v771
        %v773 = vmul.f32 %v768, %v772
        %v774 = vpack.c.bf16 %v773, %v773
        %775 = vrot.lane.b32.xlu0 %v485, 48
        %v776 = vpop.permute.xlu0 %775
        %v778 = vsel %vm489, %v774, 0
        %v781 = vsel %vm555, %v776, 0
        %783 = vmatprep.subr.bf16.mxu0 0
        %784 = vmatpush1.bf16.msra.mxu0 0
        %785 = vmatprep.subr.bf16.mxu0 0
        %786 = vmatpush1.bf16.msra.mxu0 0
        %787 = vmatprep.subr.bf16.mxu0 0
        %788 = vmatpush1.bf16.msra.mxu0 0
        %789 = vmatprep.subr.bf16.mxu0 0
        %790 = vmatpush1.bf16.msra.mxu0 0
        %791 = vmatprep.subr.bf16.mxu0 0
        %792 = vmatpush1.bf16.msra.mxu0 0
        %793 = vmatprep.subr.bf16.mxu0 0
        %794 = vmatpush1.bf16.msra.mxu0 0
        %795 = vmatprep.subr.bf16.mxu0 0
        %796 = vmatpush1.bf16.msra.mxu0 0
        %797 = vmatprep.subr.bf16.mxu0 0
        %798 = vmatpush1.bf16.msra.mxu0 %v781
        %799 = vmatprep.subr.bf16.mxu0 0
        %800 = vmatpush2.bf16.msra.mxu0 0
        %801 = vmatprep.subr.bf16.mxu0 0
        %802 = vmatpush2.bf16.msra.mxu0 0
        %803 = vmatprep.subr.bf16.mxu0 0
        %804 = vmatpush2.bf16.msra.mxu0 0
        %805 = vmatprep.subr.bf16.mxu0 0
        %806 = vmatpush2.bf16.msra.mxu0 0
        %807 = vmatprep.subr.bf16.mxu0 0
        %808 = vmatpush2.bf16.msra.mxu0 0
        %809 = vmatprep.subr.bf16.mxu0 0
        %810 = vmatpush2.bf16.msra.mxu0 0
        %811 = vmatprep.subr.bf16.mxu0 0
        %812 = vmatpush2.bf16.msra.mxu0 0
        %813 = vmatprep.subr.bf16.mxu0 0
        %814 = vmatpush2.bf16.msra.mxu0 0
        %815 = vmatprep.mubr.bf16.mxu0 0
        %816 = vmatmul.mubr.bf16.gmra.mxu0 %v778
        %v817 = vpop.f32.mrf.mxu0
        %v818 = vadd.f32 0.0, %v817
        %v819 = vpop.f32.mrf.mxu0
        %v820 = vpop.f32.mrf.mxu0
        %v821 = vpop.f32.mrf.mxu0
        %822 = vdwg.mxu0
        %823 = vrot.lane.b32.xlu0 %v485, 104
        %v824 = vpop.permute.xlu0 %823
        %825 = vrot.lane.b32.xlu0 %v485, 72
        %v826 = vpop.permute.xlu0 %825
        %v828 = vsel %vm489, %v824, 0
        %v831 = vsel %vm489, %v826, 0
        %833 = vmatprep.subr.bf16.mxu0 0
        %834 = vmatpush1.bf16.xpose.msra.mxu0 0
        %835 = vmatprep.subr.bf16.mxu0 0
        %836 = vmatpush1.bf16.xpose.msra.mxu0 0
        %837 = vmatprep.subr.bf16.mxu0 0
        %838 = vmatpush1.bf16.xpose.msra.mxu0 0
        %839 = vmatprep.subr.bf16.mxu0 0
        %840 = vmatpush1.bf16.xpose.msra.mxu0 0
        %841 = vmatprep.subr.bf16.mxu0 0
        %842 = vmatpush1.bf16.xpose.msra.mxu0 0
        %843 = vmatprep.subr.bf16.mxu0 0
        %844 = vmatpush1.bf16.xpose.msra.mxu0 0
        %845 = vmatprep.subr.bf16.mxu0 0
        %846 = vmatpush1.bf16.xpose.msra.mxu0 0
        %847 = vmatprep.subr.bf16.mxu0 0
        %848 = vmatpush1.bf16.xpose.msra.mxu0 %v831
        %849 = vmatprep.subr.bf16.mxu0 0
        %850 = vmatpush2.bf16.xpose.msra.mxu0 0
        %851 = vmatprep.subr.bf16.mxu0 0
        %852 = vmatpush2.bf16.xpose.msra.mxu0 0
        %853 = vmatprep.subr.bf16.mxu0 0
        %854 = vmatpush2.bf16.xpose.msra.mxu0 0
        %855 = vmatprep.subr.bf16.mxu0 0
        %856 = vmatpush2.bf16.xpose.msra.mxu0 0
        %857 = vmatprep.subr.bf16.mxu0 0
        %858 = vmatpush2.bf16.xpose.msra.mxu0 0
        %859 = vmatprep.subr.bf16.mxu0 0
        %860 = vmatpush2.bf16.xpose.msra.mxu0 0
        %861 = vmatprep.subr.bf16.mxu0 0
        %862 = vmatpush2.bf16.xpose.msra.mxu0 0
        %863 = vmatprep.subr.bf16.mxu0 0
        %864 = vmatpush2.bf16.xpose.msra.mxu0 0
        %865 = vmatprep.mubr.bf16.mxu0 0
        %866 = vmatmul.mubr.bf16.gmra.mxu0 %v828
        %v867 = vpop.f32.mrf.mxu0
        %v868 = vadd.f32 0.0, %v867
        %v869 = vpop.f32.mrf.mxu0
        %v870 = vpop.f32.mrf.mxu0
        %v871 = vpop.f32.mrf.mxu0
        %872 = vdwg.mxu0
        %v873 = vmul.f32 %v868, 0.35355338
        %v874 = vadd.f32 %v873, %v484
        %v875 = vsel %vm489, %v874, -inf
        %876 = vmax.xlane.f32.xlu0 %v875
        %v877 = vpop.xlane.xlu0 %876
        %v878 = vsub.f32 %v874, %v877
        %v879 = vmul.f32 %v878, 1.442695
        %v880 = vpow.pop %v879
        %v881 = vsel %vm489, %v880, 0.0
        %882 = vadd.xlane.f32.xlu0 %v881
        %v883 = vpop.xlane.xlu0 %882
        %v884 = vrcp.pop %v883
        %v885 = vmul.f32 %v880, %v884
        %v886 = vpack.c.bf16 %v885, %v885
        %887 = vrot.lane.b32.xlu0 %v485, 40
        %v888 = vpop.permute.xlu0 %887
        %v890 = vsel %vm489, %v886, 0
        %v893 = vsel %vm555, %v888, 0
        %895 = vmatprep.subr.bf16.mxu0 0
        %896 = vmatpush1.bf16.msra.mxu0 0
        %897 = vmatprep.subr.bf16.mxu0 0
        %898 = vmatpush1.bf16.msra.mxu0 0
        %899 = vmatprep.subr.bf16.mxu0 0
        %900 = vmatpush1.bf16.msra.mxu0 0
        %901 = vmatprep.subr.bf16.mxu0 0
        %902 = vmatpush1.bf16.msra.mxu0 0
        %903 = vmatprep.subr.bf16.mxu0 0
        %904 = vmatpush1.bf16.msra.mxu0 0
        %905 = vmatprep.subr.bf16.mxu0 0
        %906 = vmatpush1.bf16.msra.mxu0 0
        %907 = vmatprep.subr.bf16.mxu0 0
        %908 = vmatpush1.bf16.msra.mxu0 0
        %909 = vmatprep.subr.bf16.mxu0 0
        %910 = vmatpush1.bf16.msra.mxu0 %v893
        %911 = vmatprep.subr.bf16.mxu0 0
        %912 = vmatpush2.bf16.msra.mxu0 0
        %913 = vmatprep.subr.bf16.mxu0 0
        %914 = vmatpush2.bf16.msra.mxu0 0
        %915 = vmatprep.subr.bf16.mxu0 0
        %916 = vmatpush2.bf16.msra.mxu0 0
        %917 = vmatprep.subr.bf16.mxu0 0
        %918 = vmatpush2.bf16.msra.mxu0 0
        %919 = vmatprep.subr.bf16.mxu0 0
        %920 = vmatpush2.bf16.msra.mxu0 0
        %921 = vmatprep.subr.bf16.mxu0 0
        %922 = vmatpush2.bf16.msra.mxu0 0
        %923 = vmatprep.subr.bf16.mxu0 0
        %924 = vmatpush2.bf16.msra.mxu0 0
        %925 = vmatprep.subr.bf16.mxu0 0
        %926 = vmatpush2.bf16.msra.mxu0 0
        %927 = vmatprep.mubr.bf16.mxu0 0
        %928 = vmatmul.mubr.bf16.gmra.mxu0 %v890
        %v929 = vpop.f32.mrf.mxu0
        %v930 = vadd.f32 0.0, %v929
        %v931 = vpop.f32.mrf.mxu0
        %v932 = vpop.f32.mrf.mxu0
        %v933 = vpop.f32.mrf.mxu0
        %934 = vdwg.mxu0
        %936 = vrot.lane.b32.xlu0 %v706, 8
        %v937 = vpop.permute.xlu0 %936
        %940 = vrot.lane.b32.xlu0 %v818, 16
        %v941 = vpop.permute.xlu0 %940
        %944 = vrot.lane.b32.xlu0 %v930, 24
        %v945 = vpop.permute.xlu0 %944
        %v947 = vsel %vm489, %v594, %v937
        %vm948 = vcmask 130048
        %v949 = vsel %vm948, %v947, %v941
        %vm950 = vcmask 195584
        %v951 = vsel %vm950, %v949, %v945
        %v952 = vpack.c.bf16 %v951, %v951
        %v953 = vld [vmem:[#allocation7] sm:$0xff]
        %v954 = vld [vmem:[#allocation7 + $0x8] sm:$0xff]
        %v955 = vld [vmem:[#allocation7 + $0x10] sm:$0xff]
        %v956 = vld [vmem:[#allocation7 + $0x18] sm:$0xff]
        %v957 = vpack.c.bf16 %v954, %v953
        %v958 = vpack.c.bf16 %v956, %v955
        %v959 = vld [vmem:[%s4] sm:$0x1]
        %v961 = vlaneseq
        %v962 = vshrl.u32 %v961, 7
        %v963 = vsub.s32 0, %v962
        %v964 = vrot.slane %v959, %v963
        %v967 = vsel %vm432, %v952, 0
        %969 = vmatprep.subr.bf16.mxu0 0
        %970 = vmatpush1.bf16.msra.mxu0 0
        %971 = vmatprep.subr.bf16.mxu0 0
        %972 = vmatpush1.bf16.msra.mxu0 0
        %973 = vmatprep.subr.bf16.mxu0 0
        %974 = vmatpush1.bf16.msra.mxu0 0
        %975 = vmatprep.subr.bf16.mxu0 0
        %976 = vmatpush1.bf16.msra.mxu0 0
        %977 = vmatprep.subr.bf16.mxu0 0
        %978 = vmatpush1.bf16.msra.mxu0 0
        %979 = vmatprep.subr.bf16.mxu0 0
        %980 = vmatpush1.bf16.msra.mxu0 0
        %981 = vmatprep.subr.bf16.mxu0 0
        %982 = vmatpush1.bf16.msra.mxu0 %v958
        %983 = vmatprep.subr.bf16.mxu0 0
        %984 = vmatpush1.bf16.msra.mxu0 %v957
        %985 = vmatprep.subr.bf16.mxu0 0
        %986 = vmatpush2.bf16.msra.mxu0 0
        %987 = vmatprep.subr.bf16.mxu0 0
        %988 = vmatpush2.bf16.msra.mxu0 0
        %989 = vmatprep.subr.bf16.mxu0 0
        %990 = vmatpush2.bf16.msra.mxu0 0
        %991 = vmatprep.subr.bf16.mxu0 0
        %992 = vmatpush2.bf16.msra.mxu0 0
        %993 = vmatprep.subr.bf16.mxu0 0
        %994 = vmatpush2.bf16.msra.mxu0 0
        %995 = vmatprep.subr.bf16.mxu0 0
        %996 = vmatpush2.bf16.msra.mxu0 0
        %997 = vmatprep.subr.bf16.mxu0 0
        %998 = vmatpush2.bf16.msra.mxu0 0
        %999 = vmatprep.subr.bf16.mxu0 0
        %1000 = vmatpush2.bf16.msra.mxu0 0
        %1001 = vmatprep.mubr.bf16.mxu0 0
        %1002 = vmatmul.mubr.bf16.gmra.mxu0 %v967
        %v1003 = vpop.f32.mrf.mxu0
        %v1004 = vadd.f32 %v964, %v1003
        %v1005 = vpop.f32.mrf.mxu0
        %v1006 = vpop.f32.mrf.mxu0
        %v1007 = vpop.f32.mrf.mxu0
        %1008 = vdwg.mxu0
        %v1009 = vadd.f32 %v417, %v1004
        %v1010 = vsel %vm432, %v1009, 0.0
        %1011 = vadd.xlane.f32.xlu0 %v1010
        %v1012 = vpop.xlane.xlu0 %1011
        %v1013 = vrcp.pop 32.0
        %v1014 = vmul.f32 %v1012, %v1013
        %v1015 = vsub.f32 %v1009, %v1014
        %v1016 = vmul.f32 %v1015, %v1015
        %v1017 = vsel %vm432, %v1016, 0.0
        %1018 = vadd.xlane.f32.xlu0 %v1017
        %v1019 = vpop.xlane.xlu0 %1018
        %v1020 = vmul.f32 %v1019, %v1013
        %v1021 = vadd.f32 %v1020, 1e-05
        %v1022 = vrsqrt.pop %v1021
        %v1023 = vmul.f32 %v1015, %v1022
        %v1024 = vld [vmem:[#allocation8] sm:$0x1]
        %v1026 = vlaneseq
        %v1027 = vshrl.u32 %v1026, 7
        %v1028 = vsub.s32 0, %v1027
        %v1029 = vrot.slane %v1024, %v1028
        %v1031 = vmul.f32 %v1023, %v1029
        %v1032 = vld [vmem:[#allocation10] sm:$0x1]
        %v1034 = vlaneseq
        %v1035 = vshrl.u32 %v1034, 7
        %v1036 = vsub.s32 0, %v1035
        %v1037 = vrot.slane %v1032, %v1036
        %v1039 = vadd.f32 %v1031, %v1037
        %1040 = vst.msk [vmem:[%s412] sm:$0xff] %vm432, %v1039
        %s1041 = sand.u32 %s235, 1
        %s1042 = scalar_lea.sflag [#allocation4], %s1041
        %s1043 = sand.u32 %s235, 1
        %s1044 = smul.addr %s1043, 8
        %s1045 = scalar_lea.vmem [#allocation11], %s1044
        // Predicated region
        $region77: #{tpu_custom_call.1} parent=55 // pred_check
          %p1046 = pneg %p245
        $region78: #{tpu_custom_call.1} parent=55 // pred_check_branch
          %1048 = sbr.rel (%p1046) target = $region80
        $region79: #{tpu_custom_call.1} parent=55 // pred_region
          %s1050 = ssub.s32 128, 128
          %1051 = vsyncadd %s1042, %s1050
          %s1052 = smul.addr %s28, 128
          %s1053 = scalar_lea.hbm %s9, %s1052
          %s1055 = sshll.u32 %s1045, 4
          %s1056 = int_to_ptr.vmem [resolvable:$true] %s1055
          %1058 = dma.vmem_to_hbm [thread:$0]  %s1056, 128, %s1053, %s1042
        $region80: #{tpu_custom_call.1} parent=55 // pred_fallthru
          _
      $region56: #{tpu_custom_call.1} parent=5 // pred_fallthru
        _
      %p1059 = scmp.le.s32.totalorder 2, %s23
      // Predicated region
      $region81: #{tpu_custom_call.1} parent=5 // pred_check
        %p1060 = pneg %p1059
      $region82: #{tpu_custom_call.1} parent=5 // pred_check_branch
        %1062 = sbr.rel (%p1060) target = $region84
      $region83: #{tpu_custom_call.1} parent=5 // pred_region
        %s1063 = ssub.s32 %s23, 2
        // Predicated region
        $region85: #{tpu_custom_call.1} parent=83 // pred_check
          %p1064 = pneg %p251
        $region86: #{tpu_custom_call.1} parent=83 // pred_check_branch
          %1066 = sbr.rel (%p1064) target = $region88
        $region87: #{tpu_custom_call.1} parent=83 // pred_region
          %s1067 = sand.u32 %s236, 1
          %s1068 = scalar_lea.sflag [#allocation4], %s1067
          %s1069 = sand.u32 %s236, 1
          %s1070 = smul.addr %s1069, 8
          %s1071 = scalar_lea.vmem [#allocation11], %s1070
          %1072 = dma.done %s1068, 128
        $region88: #{tpu_custom_call.1} parent=83 // pred_fallthru
          _
      $region84: #{tpu_custom_call.1} parent=5 // pred_fallthru
        _
    $region6: #{tpu_custom_call.1} parent=1 // loop_footer
      %s27 = sadd.s32 1, %s23
    $region7: #{tpu_custom_call.1} parent=1 // loop_footer_branch
      %22 = sbr.rel target = $region3
    $region8: #{tpu_custom_call.1} parent=1 // loop_exit
      _
    %1073 = vsyncpa [#allocation3], 1
    %s1074 = scalar_lea.sflag [#allocation3], 1
    %1075 = vsyncpa %s1074, 1
    %1076 = vsyncpa [#allocation6], 1
    %1077 = vsyncpa [#allocation9], 1
    %1078 = vsyncpa [#allocation4], 1
    %s1079 = scalar_lea.sflag [#allocation4], 1
    %1080 = vsyncpa %s1079, 1

</llo_original>
